<compile_context>
chip_gen: v7x
topology: tpu7x:2x2x1
jax: 0.10.0
libtpu: 0.0.40
codegen_flags: <defaults>
</compile_context>

<pallas_src>
import functools

import jax
import jax.numpy as jnp
from jax import lax
from jax.experimental import pallas as pl
from jax.experimental.pallas import tpu as pltpu

EPS = 1e-5  # torch.nn.LayerNorm default


def _layernorm(x, g, b):
    mu = jnp.mean(x, axis=-1, keepdims=True)
    var = jnp.mean((x - mu) ** 2, axis=-1, keepdims=True)
    return (x - mu) * lax.rsqrt(var + EPS) * g + b


def _nt(a, b):
    """a @ b.T on the MXU: bf16 operands, f32 accumulation."""
    return lax.dot_general(a.astype(jnp.bfloat16), b.astype(jnp.bfloat16),
                           (((1,), (1,)), ((), ())),
                           preferred_element_type=jnp.float32)


# ---------------- fused per-(batch, layer) kernel ----------------

def model_kernel(x_ref, emb_w_ref, emb_b_ref, pos_ref, mask_ref,
                 ln1g_ref, ln1b_ref, wqkv_ref, wo_ref, bo_ref,
                 ln2g_ref, ln2b_ref, w1_ref, b1_ref, w2_ref, b2_ref,
                 lnf_g_ref, lnf_b_ref, o_ref, x_scr, *, n_head):
    l = pl.program_id(1)
    n_layer = pl.num_programs(1)
    T, C = x_scr.shape
    hs = C // n_head
    scale = 1.0 / (hs ** 0.5)
    bf16 = jnp.bfloat16

    # ---- l == 0: embedding linear + positional embedding into the residual ----
    @pl.when(l == 0)
    def _():
        x_scr[...] = _nt(x_ref[...], emb_w_ref[...]) + emb_b_ref[...] + pos_ref[...]

    x = x_scr[...]                                      # (T, C) f32 residual

    # ---- causal multi-head self-attention on LN1(x), fused QKV ----
    xn = _layernorm(x, ln1g_ref[...], ln1b_ref[...])
    qkv = _nt(xn, wqkv_ref[...])                        # (T, 3C) f32, one MXU pass
    # head-major rank-3 tensors: lane-slice per head, stack on a new leading axis
    q = jnp.stack([qkv[:, h * hs:(h + 1) * hs] for h in range(n_head)])           # (H,T,hs)
    k = jnp.stack([qkv[:, C + h * hs:C + (h + 1) * hs] for h in range(n_head)])
    v = jnp.stack([qkv[:, 2 * C + h * hs:2 * C + (h + 1) * hs] for h in range(n_head)])
    # head-batched score / PV matmuls (bf16 operands, f32 accumulation)
    s = jnp.einsum('hqd,hkd->hqk', q.astype(bf16), k.astype(bf16),
                   preferred_element_type=jnp.float32) * scale                     # (H,T,T)
    s = s + mask_ref[...]                               # additive causal bias (0 / -1e30)
    p = jnp.exp(s - jnp.max(s, axis=-1, keepdims=True))
    p = p * pl.reciprocal(jnp.sum(p, axis=-1, keepdims=True), approx=True)
    o = jnp.einsum('hqk,hkd->hqd', p.astype(bf16), v.astype(bf16),
                   preferred_element_type=jnp.float32)                             # (H,T,hs)
    # concat heads along the last axis in registers -> one full-width projection
    o_cat = jnp.concatenate([o[h] for h in range(n_head)], axis=-1)                # (T, C)
    x = x + _nt(o_cat, wo_ref[...]) + bo_ref[...]

    # ---- ReLU MLP on LN2(x) ----
    xn2 = _layernorm(x, ln2g_ref[...], ln2b_ref[...])
    h1 = jnp.maximum(_nt(xn2, w1_ref[...]) + b1_ref[...], 0.0)
    x = x + _nt(h1, w2_ref[...]) + b2_ref[...]

    x_scr[...] = x                                      # residual stays in VMEM

    # ---- last layer: final LayerNorm into the output block ----
    @pl.when(l == n_layer - 1)
    def _():
        o_ref[...] = _layernorm(x, lnf_g_ref[...], lnf_b_ref[...])


# ---------------- wrapper ----------------

def no_head_forward(idx, params, n_head):
    """idx: (B, 3, M, T) float32 -> (B, T, n_embd)"""
    B, _, M, T = idx.shape
    C = params['emb_w'].shape[0]
    H = params['layers'][0]['w1'].shape[0]
    F = 3 * M
    L = len(params['layers'])
    assert C % n_head == 0, "n_embd must be divisible by n_head"
    bf16 = jnp.bfloat16

    # Plain-JAX glue matching the torch permute/reshape; pos passed as (T, C).
    x = jnp.transpose(idx, (0, 3, 2, 1)).reshape(B, T, F).astype(jnp.float32)
    pos = params['pos_table'][:T]                                           # (T, C)
    mask_bias = jnp.where(jnp.tril(jnp.ones((T, T), bool)),
                          0.0, -1e30).astype(jnp.float32)                   # (T, T)

    stack = lambda name: jnp.stack([lp[name] for lp in params['layers']])
    # fused QKV weight: rows = [wq; wk; wv] -> (L, 3C, C), bf16 for the MXU
    wqkv = jnp.stack([jnp.concatenate([lp['wq'], lp['wk'], lp['wv']], axis=0)
                      for lp in params['layers']]).astype(bf16)

    def const_spec(shape):          # fetched once (index constant over the grid)
        nd = len(shape)
        return pl.BlockSpec(shape, lambda b, l, nd=nd: (0,) * nd)

    def layer_spec(arr):            # one layer slice per inner grid step
        rest = tuple(arr.shape[1:])
        nz = len(rest)
        return pl.BlockSpec((None,) + rest, lambda b, l, nz=nz: (l,) + (0,) * nz)

    pairs = [
        (x,                              pl.BlockSpec((None, T, F), lambda b, l: (b, 0, 0))),
        (params['emb_w'].astype(bf16),   const_spec((C, F))),
        (params['emb_b'],                const_spec((1, C))),
        (pos,                            const_spec((T, C))),
        (mask_bias,                      const_spec((T, T))),
        (stack('ln1g'),                  None),
        (stack('ln1b'),                  None),
        (wqkv,                           None),
        (stack('wo').astype(bf16),       None),
        (stack('bo'),                    None),
        (stack('ln2g'),                  None),
        (stack('ln2b'),                  None),
        (stack('w1').astype(bf16),       None),
        (stack('b1'),                    None),
        (stack('w2').astype(bf16),       None),
        (stack('b2'),                    None),
        (params['lnf_g'],                const_spec((1, C))),
        (params['lnf_b'],                const_spec((1, C))),
    ]
    args = [a for a, _ in pairs]
    in_specs = [(s if s is not None else layer_spec(a)) for a, s in pairs]

    # Explicit scoped-VMEM budget: ~2 pipeline buffers of one layer's bf16
    # weights + activations/intermediates + headroom.  Only raise it above the
    # smallest default (16 MiB) when actually needed; cap at 48 MiB so v7x's
    # 64 MiB VMEM keeps double-buffer headroom.
    per_layer_w = (4 * C * C + 2 * H * C) * 2                       # bf16 bytes
    act = (T * F + 3 * T * C + 3 * T * C + n_head * T * T + T * H) * 4
    est = 2 * 2 * per_layer_w + 2 * act + (2 << 20)
    cp_kwargs = dict(dimension_semantics=("parallel", "arbitrary"))
    if est > 16 * 1024 * 1024:
        cp_kwargs["vmem_limit_bytes"] = min(est, 48 * 1024 * 1024)

    out = pl.pallas_call(
        functools.partial(model_kernel, n_head=n_head),
        out_shape=jax.ShapeDtypeStruct((B, T, C), jnp.float32),
        grid=(B, L),
        in_specs=in_specs,
        out_specs=pl.BlockSpec((None, T, C), lambda b, l: (b, 0, 0)),
        scratch_shapes=[pltpu.VMEM((T, C), jnp.float32)],           # residual carry
        compiler_params=pltpu.CompilerParams(**cp_kwargs),
    )(*args)
    # TODO(synk): for long sequences, flash-tile the attention over KV chunks
    # (running max/sum scratch) and tile T — full (T,T) scores will not fit
    # v7x's 64 MiB VMEM at large T.
    return out


# ---------------- params (deterministic, matches _init_weights semantics) ----------------

def init_params(key, mic_num, tot_timesteps, n_embd, n_hidden, n_layer):
    C, H = n_embd, n_hidden
    keys = iter(jax.random.split(key, 2 + 6 * n_layer))
    nrm = lambda shape: 0.02 * jax.random.normal(next(keys), shape, jnp.float32)
    zeros = lambda shape: jnp.zeros(shape, jnp.float32)
    ones = lambda shape: jnp.ones(shape, jnp.float32)
    params = {
        'pos_table': nrm((tot_timesteps, C)),
        'emb_w': nrm((C, 3 * mic_num)), 'emb_b': zeros((1, C)),
        'lnf_g': ones((1, C)), 'lnf_b': zeros((1, C)),
        'layers': [],
    }
    for _ in range(n_layer):
        params['layers'].append({
            'ln1g': ones((1, C)), 'ln1b': zeros((1, C)),
            'wq': nrm((C, C)), 'wk': nrm((C, C)), 'wv': nrm((C, C)),
            'wo': nrm((C, C)), 'bo': zeros((1, C)),
            'ln2g': ones((1, C)), 'ln2b': zeros((1, C)),
            'w1': nrm((H, C)), 'b1': zeros((1, H)),
            'w2': nrm((C, H)), 'b2': zeros((1, C)),
        })
    return params


# ---------------- pure-JAX references (for correctness checks) ----------------

def ref_forward_f32(idx, params, n_head):
    """Exact PyTorch-semantics reference, f32 everywhere."""
    B, _, M, T = idx.shape
    C = params['emb_w'].shape[0]
    hs = C // n_head
    x = jnp.transpose(idx, (0, 3, 2, 1)).reshape(B, T, 3 * M)
    x = x @ params['emb_w'].T + params['emb_b'] + params['pos_table'][:T][None]
    mask = jnp.tril(jnp.ones((T, T), bool))
    for p in params['layers']:
        xn = _layernorm(x, p['ln1g'], p['ln1b'])
        q = (xn @ p['wq'].T).reshape(B, T, n_head, hs).transpose(0, 2, 1, 3)
        k = (xn @ p['wk'].T).reshape(B, T, n_head, hs).transpose(0, 2, 1, 3)
        v = (xn @ p['wv'].T).reshape(B, T, n_head, hs).transpose(0, 2, 1, 3)
        s = (q @ k.transpose(0, 1, 3, 2)) / (hs ** 0.5)
        s = jnp.where(mask, s, -1e30)
        a = jax.nn.softmax(s, axis=-1)
        o = (a @ v).transpose(0, 2, 1, 3).reshape(B, T, C)
        x = x + o @ p['wo'].T + p['bo']
        xn2 = _layernorm(x, p['ln2g'], p['ln2b'])
        x = x + jnp.maximum(xn2 @ p['w1'].T + p['b1'], 0.0) @ p['w2'].T + p['b2']
    return _layernorm(x, params['lnf_g'], params['lnf_b'])


def ref_forward_bf16(idx, params, n_head):
    """Same math, but with the kernel's bf16-operand / f32-accumulate matmuls."""
    bf = jnp.bfloat16

    def nt(a, b):  # a @ b.T
        return jnp.dot(a.astype(bf), b.astype(bf).T, preferred_element_type=jnp.float32)

    B, _, M, T = idx.shape
    C = params['emb_w'].shape[0]
    hs = C // n_head
    x = jnp.transpose(idx, (0, 3, 2, 1)).reshape(B, T, 3 * M)
    x = nt(x, params['emb_w']) + params['emb_b'] + params['pos_table'][:T][None]
    mask = jnp.tril(jnp.ones((T, T), bool))
    for p in params['layers']:
        xn = _layernorm(x, p['ln1g'], p['ln1b'])
        q = nt(xn, p['wq']).reshape(B, T, n_head, hs).transpose(0, 2, 1, 3)
        k = nt(xn, p['wk']).reshape(B, T, n_head, hs).transpose(0, 2, 1, 3)
        v = nt(xn, p['wv']).reshape(B, T, n_head, hs).transpose(0, 2, 1, 3)
        s = jnp.einsum('bhqd,bhkd->bhqk', q.astype(bf), k.astype(bf),
                       preferred_element_type=jnp.float32) / (hs ** 0.5)
        s = jnp.where(mask, s, -1e30)
        a = jax.nn.softmax(s, axis=-1)
        o = jnp.einsum('bhqk,bhkd->bhqd', a.astype(bf), v.astype(bf),
                       preferred_element_type=jnp.float32)
        o = o.transpose(0, 2, 1, 3).reshape(B, T, C)
        x = x + nt(o, p['wo']) + p['bo']
        xn2 = _layernorm(x, p['ln2g'], p['ln2b'])
        x = x + nt(jnp.maximum(nt(xn2, p['w1']) + p['b1'], 0.0), p['w2']) + p['b2']
    return _layernorm(x, params['lnf_g'], params['lnf_b'])


if __name__ == "__main__":
    B, M, T = 2, 4, 8
    n_embd, n_hidden, n_head, n_layer, tot_timesteps = 32, 64, 4, 2, 16

    key = jax.random.PRNGKey(0)
    kx, kp = jax.random.split(key)
    idx = jax.random.normal(kx, (B, 3, M, T), jnp.float32)
    params = init_params(kp, M, tot_timesteps, n_embd, n_hidden, n_layer)

    out = no_head_forward(idx, params, n_head)
    out = jax.block_until_ready(out)
    assert out.shape == (B, T, n_embd), out.shape

    # strict check vs a reference that mirrors the kernel's bf16 matmul operands
    ref_b = ref_forward_bf16(idx, params, n_head)
    err_b = float(jnp.max(jnp.abs(out - ref_b)))
    assert jnp.allclose(out, ref_b, atol=3e-2, rtol=3e-2), err_b

    # loose sanity check vs the exact f32 PyTorch-semantics reference
    ref_f = ref_forward_f32(idx, params, n_head)
    err_f = float(jnp.max(jnp.abs(out - ref_f)))
    assert jnp.allclose(out, ref_f, atol=1.5e-1, rtol=1.5e-1), err_f

    print("KERNEL_OK")
</pallas_src>

<mosaic_0001>
module attributes {stable_mosaic.version = 11 : i64} {
  func.func @model_kernel(%arg0: i32, %arg1: i32, %arg2: memref<1x8x12xf32, #tpu.memory_space<vmem>>, %arg3: memref<32x12xbf16, #tpu.memory_space<vmem>>, %arg4: memref<1x32xf32, #tpu.memory_space<vmem>>, %arg5: memref<8x32xf32, #tpu.memory_space<vmem>>, %arg6: memref<8x8xf32, #tpu.memory_space<vmem>>, %arg7: memref<1x1x32xf32, #tpu.memory_space<vmem>>, %arg8: memref<1x1x32xf32, #tpu.memory_space<vmem>>, %arg9: memref<1x96x32xbf16, #tpu.memory_space<vmem>>, %arg10: memref<1x32x32xbf16, #tpu.memory_space<vmem>>, %arg11: memref<1x1x32xf32, #tpu.memory_space<vmem>>, %arg12: memref<1x1x32xf32, #tpu.memory_space<vmem>>, %arg13: memref<1x1x32xf32, #tpu.memory_space<vmem>>, %arg14: memref<1x64x32xbf16, #tpu.memory_space<vmem>>, %arg15: memref<1x1x64xf32, #tpu.memory_space<vmem>>, %arg16: memref<1x32x64xbf16, #tpu.memory_space<vmem>>, %arg17: memref<1x1x32xf32, #tpu.memory_space<vmem>>, %arg18: memref<1x32xf32, #tpu.memory_space<vmem>>, %arg19: memref<1x32xf32, #tpu.memory_space<vmem>>, %arg20: memref<1x8x32xf32, #tpu.memory_space<vmem>>, %arg21: memref<8x32xf32, #tpu.memory_space<vmem>>) attributes {dimension_semantics = [#tpu.dimension_semantics<parallel>, #tpu.dimension_semantics<arbitrary>], iteration_bounds = array<i64: 2, 2>, scalar_prefetch = 0 : i64, scratch_operands = 1 : i64, tpu.core_type = #tpu.core_type<tc>, window_params = [{transform_indices = @transform_0, window_bounds = array<i64: 1, 8, 12>}, {pipeline_mode = #tpu.pipeline_mode<synchronous>, transform_indices = @transform_1, window_bounds = array<i64: 32, 12>}, {pipeline_mode = #tpu.pipeline_mode<synchronous>, transform_indices = @transform_2, window_bounds = array<i64: 1, 32>}, {pipeline_mode = #tpu.pipeline_mode<synchronous>, transform_indices = @transform_3, window_bounds = array<i64: 8, 32>}, {pipeline_mode = #tpu.pipeline_mode<synchronous>, transform_indices = @transform_4, window_bounds = array<i64: 8, 8>}, {transform_indices = @transform_5, window_bounds = array<i64: 1, 1, 32>}, {transform_indices = @transform_6, window_bounds = array<i64: 1, 1, 32>}, {transform_indices = @transform_7, window_bounds = array<i64: 1, 96, 32>}, {transform_indices = @transform_8, window_bounds = array<i64: 1, 32, 32>}, {transform_indices = @transform_9, window_bounds = array<i64: 1, 1, 32>}, {transform_indices = @transform_10, window_bounds = array<i64: 1, 1, 32>}, {transform_indices = @transform_11, window_bounds = array<i64: 1, 1, 32>}, {transform_indices = @transform_12, window_bounds = array<i64: 1, 64, 32>}, {transform_indices = @transform_13, window_bounds = array<i64: 1, 1, 64>}, {transform_indices = @transform_14, window_bounds = array<i64: 1, 32, 64>}, {transform_indices = @transform_15, window_bounds = array<i64: 1, 1, 32>}, {pipeline_mode = #tpu.pipeline_mode<synchronous>, transform_indices = @transform_16, window_bounds = array<i64: 1, 32>}, {pipeline_mode = #tpu.pipeline_mode<synchronous>, transform_indices = @transform_17, window_bounds = array<i64: 1, 32>}, {transform_indices = @transform_18, window_bounds = array<i64: 1, 8, 32>}]} {
    %c0_i32 = arith.constant 0 : i32
    %0 = arith.cmpi eq, %arg1, %c0_i32 : i32
    %1 = arith.extui %0 : i1 to i32
    %c0_i32_0 = arith.constant 0 : i32
    %2 = arith.cmpi ne, %1, %c0_i32_0 : i32
    scf.if %2 {
      %c0_59 = arith.constant 0 : index
      %c0_60 = arith.constant 0 : index
      %c0_61 = arith.constant 0 : index
      %150 = vector.load %arg2[%c0_59, %c0_60, %c0_61] : memref<1x8x12xf32, #tpu.memory_space<vmem>>, vector<1x8x12xf32>
      %151 = vector.shape_cast %150 : vector<1x8x12xf32> to vector<8x12xf32>
      %c0_62 = arith.constant 0 : index
      %c0_63 = arith.constant 0 : index
      %152 = vector.load %arg3[%c0_62, %c0_63] : memref<32x12xbf16, #tpu.memory_space<vmem>>, vector<32x12xbf16>
      %153 = arith.truncf %151 : vector<8x12xf32> to vector<8x12xbf16>
      %cst_64 = arith.constant dense<0.000000e+00> : vector<8x32xf32>
      %154 = tpu.matmul %153, %152, %cst_64 {dimension_numbers = #tpu.dot_dimension_numbers<[1], [1], [0], [0], [0, 0, 1, 0], [], []>} : vector<8x12xbf16>, vector<32x12xbf16>, vector<8x32xf32> -> vector<8x32xf32>
      %c0_65 = arith.constant 0 : index
      %c0_66 = arith.constant 0 : index
      %155 = vector.load %arg4[%c0_65, %c0_66] : memref<1x32xf32, #tpu.memory_space<vmem>>, vector<1x32xf32>
      %156 = vector.broadcast %155 : vector<1x32xf32> to vector<8x32xf32>
      %157 = arith.addf %154, %156 : vector<8x32xf32>
      %c0_67 = arith.constant 0 : index
      %c0_68 = arith.constant 0 : index
      %158 = vector.load %arg5[%c0_67, %c0_68] : memref<8x32xf32, #tpu.memory_space<vmem>>, vector<8x32xf32>
      %159 = arith.addf %157, %158 : vector<8x32xf32>
      %c0_69 = arith.constant 0 : index
      %c0_70 = arith.constant 0 : index
      %160 = vector.load %arg21[%c0_69, %c0_70] : memref<8x32xf32, #tpu.memory_space<vmem>>, vector<8x32xf32>
      tpu.vector_store %arg21[%c0_69, %c0_70], %159 {strides = array<i32>} : memref<8x32xf32, #tpu.memory_space<vmem>>, vector<8x32xf32>,
    } else {
    }
    %c0 = arith.constant 0 : index
    %c0_1 = arith.constant 0 : index
    %3 = vector.load %arg21[%c0, %c0_1] : memref<8x32xf32, #tpu.memory_space<vmem>>, vector<8x32xf32>
    %c0_2 = arith.constant 0 : index
    %c0_3 = arith.constant 0 : index
    %c0_4 = arith.constant 0 : index
    %4 = vector.load %arg7[%c0_2, %c0_3, %c0_4] : memref<1x1x32xf32, #tpu.memory_space<vmem>>, vector<1x1x32xf32>
    %5 = vector.shape_cast %4 : vector<1x1x32xf32> to vector<1x32xf32>
    %c0_5 = arith.constant 0 : index
    %c0_6 = arith.constant 0 : index
    %c0_7 = arith.constant 0 : index
    %6 = vector.load %arg8[%c0_5, %c0_6, %c0_7] : memref<1x1x32xf32, #tpu.memory_space<vmem>>, vector<1x1x32xf32>
    %7 = vector.shape_cast %6 : vector<1x1x32xf32> to vector<1x32xf32>
    %cst = arith.constant dense<0.000000e+00> : vector<8xf32>
    %8 = vector.multi_reduction <add>, %3, %cst [1] : vector<8x32xf32> to vector<8xf32>
    %9 = vector.shape_cast %8 : vector<8xf32> to vector<8x1xf32>
    %cst_8 = arith.constant 3.200000e+01 : f32
    %10 = vector.broadcast %cst_8 : f32 to vector<8x1xf32>
    %11 = arith.divf %9, %10 : vector<8x1xf32>
    %12 = vector.broadcast %11 : vector<8x1xf32> to vector<8x32xf32>
    %13 = arith.subf %3, %12 : vector<8x32xf32>
    %14 = arith.mulf %13, %13 : vector<8x32xf32>
    %cst_9 = arith.constant dense<0.000000e+00> : vector<8xf32>
    %15 = vector.multi_reduction <add>, %14, %cst_9 [1] : vector<8x32xf32> to vector<8xf32>
    %16 = vector.shape_cast %15 : vector<8xf32> to vector<8x1xf32>
    %cst_10 = arith.constant 3.200000e+01 : f32
    %17 = vector.broadcast %cst_10 : f32 to vector<8x1xf32>
    %18 = arith.divf %16, %17 : vector<8x1xf32>
    %19 = vector.broadcast %11 : vector<8x1xf32> to vector<8x32xf32>
    %20 = arith.subf %3, %19 : vector<8x32xf32>
    %cst_11 = arith.constant 9.99999974E-6 : f32
    %21 = vector.broadcast %cst_11 : f32 to vector<8x1xf32>
    %22 = arith.addf %18, %21 : vector<8x1xf32>
    %23 = math.rsqrt %22 : vector<8x1xf32>
    %24 = vector.broadcast %23 : vector<8x1xf32> to vector<8x32xf32>
    %25 = arith.mulf %20, %24 : vector<8x32xf32>
    %26 = vector.broadcast %5 : vector<1x32xf32> to vector<8x32xf32>
    %27 = arith.mulf %25, %26 : vector<8x32xf32>
    %28 = vector.broadcast %7 : vector<1x32xf32> to vector<8x32xf32>
    %29 = arith.addf %27, %28 : vector<8x32xf32>
    %c0_12 = arith.constant 0 : index
    %c0_13 = arith.constant 0 : index
    %c0_14 = arith.constant 0 : index
    %30 = vector.load %arg9[%c0_12, %c0_13, %c0_14] : memref<1x96x32xbf16, #tpu.memory_space<vmem>>, vector<1x96x32xbf16>
    %31 = vector.shape_cast %30 : vector<1x96x32xbf16> to vector<96x32xbf16>
    %32 = arith.truncf %29 : vector<8x32xf32> to vector<8x32xbf16>
    %cst_15 = arith.constant dense<0.000000e+00> : vector<8x96xf32>
    %33 = tpu.matmul %32, %31, %cst_15 {dimension_numbers = #tpu.dot_dimension_numbers<[1], [1], [0], [0], [0, 0, 1, 0], [], []>} : vector<8x32xbf16>, vector<96x32xbf16>, vector<8x96xf32> -> vector<8x96xf32>
    %34 = vector.extract_strided_slice %33 {offsets = [0, 0], sizes = [8, 8], strides = [1, 1]} : vector<8x96xf32> to vector<8x8xf32>
    %35 = vector.extract_strided_slice %33 {offsets = [0, 8], sizes = [8, 8], strides = [1, 1]} : vector<8x96xf32> to vector<8x8xf32>
    %36 = vector.extract_strided_slice %33 {offsets = [0, 16], sizes = [8, 8], strides = [1, 1]} : vector<8x96xf32> to vector<8x8xf32>
    %37 = vector.extract_strided_slice %33 {offsets = [0, 24], sizes = [8, 8], strides = [1, 1]} : vector<8x96xf32> to vector<8x8xf32>
    %38 = vector.shape_cast %34 : vector<8x8xf32> to vector<1x8x8xf32>
    %39 = vector.shape_cast %35 : vector<8x8xf32> to vector<1x8x8xf32>
    %40 = vector.shape_cast %36 : vector<8x8xf32> to vector<1x8x8xf32>
    %41 = vector.shape_cast %37 : vector<8x8xf32> to vector<1x8x8xf32>
    %42 = tpu.concatenate %38, %39, %40, %41 in 0 : vector<1x8x8xf32>, vector<1x8x8xf32>, vector<1x8x8xf32>, vector<1x8x8xf32> -> vector<4x8x8xf32>
    %43 = vector.extract_strided_slice %33 {offsets = [0, 32], sizes = [8, 8], strides = [1, 1]} : vector<8x96xf32> to vector<8x8xf32>
    %44 = vector.extract_strided_slice %33 {offsets = [0, 40], sizes = [8, 8], strides = [1, 1]} : vector<8x96xf32> to vector<8x8xf32>
    %45 = vector.extract_strided_slice %33 {offsets = [0, 48], sizes = [8, 8], strides = [1, 1]} : vector<8x96xf32> to vector<8x8xf32>
    %46 = vector.extract_strided_slice %33 {offsets = [0, 56], sizes = [8, 8], strides = [1, 1]} : vector<8x96xf32> to vector<8x8xf32>
    %47 = vector.shape_cast %43 : vector<8x8xf32> to vector<1x8x8xf32>
    %48 = vector.shape_cast %44 : vector<8x8xf32> to vector<1x8x8xf32>
    %49 = vector.shape_cast %45 : vector<8x8xf32> to vector<1x8x8xf32>
    %50 = vector.shape_cast %46 : vector<8x8xf32> to vector<1x8x8xf32>
    %51 = tpu.concatenate %47, %48, %49, %50 in 0 : vector<1x8x8xf32>, vector<1x8x8xf32>, vector<1x8x8xf32>, vector<1x8x8xf32> -> vector<4x8x8xf32>
    %52 = vector.extract_strided_slice %33 {offsets = [0, 64], sizes = [8, 8], strides = [1, 1]} : vector<8x96xf32> to vector<8x8xf32>
    %53 = vector.extract_strided_slice %33 {offsets = [0, 72], sizes = [8, 8], strides = [1, 1]} : vector<8x96xf32> to vector<8x8xf32>
    %54 = vector.extract_strided_slice %33 {offsets = [0, 80], sizes = [8, 8], strides = [1, 1]} : vector<8x96xf32> to vector<8x8xf32>
    %55 = vector.extract_strided_slice %33 {offsets = [0, 88], sizes = [8, 8], strides = [1, 1]} : vector<8x96xf32> to vector<8x8xf32>
    %56 = vector.shape_cast %52 : vector<8x8xf32> to vector<1x8x8xf32>
    %57 = vector.shape_cast %53 : vector<8x8xf32> to vector<1x8x8xf32>
    %58 = vector.shape_cast %54 : vector<8x8xf32> to vector<1x8x8xf32>
    %59 = vector.shape_cast %55 : vector<8x8xf32> to vector<1x8x8xf32>
    %60 = tpu.concatenate %56, %57, %58, %59 in 0 : vector<1x8x8xf32>, vector<1x8x8xf32>, vector<1x8x8xf32>, vector<1x8x8xf32> -> vector<4x8x8xf32>
    %61 = arith.truncf %42 : vector<4x8x8xf32> to vector<4x8x8xbf16>
    %62 = arith.truncf %51 : vector<4x8x8xf32> to vector<4x8x8xbf16>
    "tpu.trace_start"() <{level = 10 : i32, message = "hqd,hkd->hqk"}> : () -> ()
    %cst_16 = arith.constant dense<0.000000e+00> : vector<4x8x8xf32>
    %63 = tpu.matmul %61, %62, %cst_16 {dimension_numbers = #tpu.dot_dimension_numbers<[2], [2], [1], [1], [0, 0, 0, 1, 1, 1], [0], [0]>} : vector<4x8x8xbf16>, vector<4x8x8xbf16>, vector<4x8x8xf32> -> vector<4x8x8xf32>
    "tpu.trace_stop"() : () -> ()
    %cst_17 = arith.constant 0.353553385 : f32
    %64 = vector.broadcast %cst_17 : f32 to vector<4x8x8xf32>
    %65 = arith.mulf %63, %64 : vector<4x8x8xf32>
    %c0_18 = arith.constant 0 : index
    %c0_19 = arith.constant 0 : index
    %66 = vector.load %arg6[%c0_18, %c0_19] : memref<8x8xf32, #tpu.memory_space<vmem>>, vector<8x8xf32>
    %67 = vector.shape_cast %66 : vector<8x8xf32> to vector<1x8x8xf32>
    %68 = vector.broadcast %67 : vector<1x8x8xf32> to vector<4x8x8xf32>
    %69 = arith.addf %65, %68 : vector<4x8x8xf32>
    %cst_20 = arith.constant dense<0xFF800000> : vector<4x8xf32>
    %70 = vector.multi_reduction <maximumf>, %69, %cst_20 [2] : vector<4x8x8xf32> to vector<4x8xf32>
    %71 = vector.shape_cast %70 : vector<4x8xf32> to vector<4x8x1xf32>
    %72 = vector.broadcast %71 : vector<4x8x1xf32> to vector<4x8x8xf32>
    %73 = arith.subf %69, %72 : vector<4x8x8xf32>
    %74 = math.exp %73 : vector<4x8x8xf32>
    %cst_21 = arith.constant dense<0.000000e+00> : vector<4x8xf32>
    %75 = vector.multi_reduction <add>, %74, %cst_21 [2] : vector<4x8x8xf32> to vector<4x8xf32>
    %76 = vector.shape_cast %75 : vector<4x8xf32> to vector<4x8x1xf32>
    %77 = tpu.reciprocal %76 {approx = true} : vector<4x8x1xf32> -> vector<4x8x1xf32>
    %78 = vector.broadcast %77 : vector<4x8x1xf32> to vector<4x8x8xf32>
    %79 = arith.mulf %74, %78 : vector<4x8x8xf32>
    %80 = arith.truncf %79 : vector<4x8x8xf32> to vector<4x8x8xbf16>
    %81 = arith.truncf %60 : vector<4x8x8xf32> to vector<4x8x8xbf16>
    "tpu.trace_start"() <{level = 10 : i32, message = "hqk,hkd->hqd"}> : () -> ()
    %cst_22 = arith.constant dense<0.000000e+00> : vector<4x8x8xf32>
    %82 = tpu.matmul %80, %81, %cst_22 {dimension_numbers = #tpu.dot_dimension_numbers<[2], [1], [1], [2], [0, 0, 0, 1, 1, 2], [0], [0]>} : vector<4x8x8xbf16>, vector<4x8x8xbf16>, vector<4x8x8xf32> -> vector<4x8x8xf32>
    "tpu.trace_stop"() : () -> ()
    %83 = vector.extract_strided_slice %82 {offsets = [0, 0, 0], sizes = [1, 8, 8], strides = [1, 1, 1]} : vector<4x8x8xf32> to vector<1x8x8xf32>
    %84 = vector.shape_cast %83 : vector<1x8x8xf32> to vector<8x8xf32>
    %85 = vector.extract_strided_slice %82 {offsets = [1, 0, 0], sizes = [1, 8, 8], strides = [1, 1, 1]} : vector<4x8x8xf32> to vector<1x8x8xf32>
    %86 = vector.shape_cast %85 : vector<1x8x8xf32> to vector<8x8xf32>
    %87 = vector.extract_strided_slice %82 {offsets = [2, 0, 0], sizes = [1, 8, 8], strides = [1, 1, 1]} : vector<4x8x8xf32> to vector<1x8x8xf32>
    %88 = vector.shape_cast %87 : vector<1x8x8xf32> to vector<8x8xf32>
    %89 = vector.extract_strided_slice %82 {offsets = [3, 0, 0], sizes = [1, 8, 8], strides = [1, 1, 1]} : vector<4x8x8xf32> to vector<1x8x8xf32>
    %90 = vector.shape_cast %89 : vector<1x8x8xf32> to vector<8x8xf32>
    %91 = tpu.concatenate %84, %86, %88, %90 in 1 : vector<8x8xf32>, vector<8x8xf32>, vector<8x8xf32>, vector<8x8xf32> -> vector<8x32xf32>
    %c0_23 = arith.constant 0 : index
    %c0_24 = arith.constant 0 : index
    %c0_25 = arith.constant 0 : index
    %92 = vector.load %arg10[%c0_23, %c0_24, %c0_25] : memref<1x32x32xbf16, #tpu.memory_space<vmem>>, vector<1x32x32xbf16>
    %93 = vector.shape_cast %92 : vector<1x32x32xbf16> to vector<32x32xbf16>
    %94 = arith.truncf %91 : vector<8x32xf32> to vector<8x32xbf16>
    %cst_26 = arith.constant dense<0.000000e+00> : vector<8x32xf32>
    %95 = tpu.matmul %94, %93, %cst_26 {dimension_numbers = #tpu.dot_dimension_numbers<[1], [1], [0], [0], [0, 0, 1, 0], [], []>} : vector<8x32xbf16>, vector<32x32xbf16>, vector<8x32xf32> -> vector<8x32xf32>
    %96 = arith.addf %3, %95 : vector<8x32xf32>
    %c0_27 = arith.constant 0 : index
    %c0_28 = arith.constant 0 : index
    %c0_29 = arith.constant 0 : index
    %97 = vector.load %arg11[%c0_27, %c0_28, %c0_29] : memref<1x1x32xf32, #tpu.memory_space<vmem>>, vector<1x1x32xf32>
    %98 = vector.shape_cast %97 : vector<1x1x32xf32> to vector<1x32xf32>
    %99 = vector.broadcast %98 : vector<1x32xf32> to vector<8x32xf32>
    %100 = arith.addf %96, %99 : vector<8x32xf32>
    %c0_30 = arith.constant 0 : index
    %c0_31 = arith.constant 0 : index
    %c0_32 = arith.constant 0 : index
    %101 = vector.load %arg12[%c0_30, %c0_31, %c0_32] : memref<1x1x32xf32, #tpu.memory_space<vmem>>, vector<1x1x32xf32>
    %102 = vector.shape_cast %101 : vector<1x1x32xf32> to vector<1x32xf32>
    %c0_33 = arith.constant 0 : index
    %c0_34 = arith.constant 0 : index
    %c0_35 = arith.constant 0 : index
    %103 = vector.load %arg13[%c0_33, %c0_34, %c0_35] : memref<1x1x32xf32, #tpu.memory_space<vmem>>, vector<1x1x32xf32>
    %104 = vector.shape_cast %103 : vector<1x1x32xf32> to vector<1x32xf32>
    %cst_36 = arith.constant dense<0.000000e+00> : vector<8xf32>
    %105 = vector.multi_reduction <add>, %100, %cst_36 [1] : vector<8x32xf32> to vector<8xf32>
    %106 = vector.shape_cast %105 : vector<8xf32> to vector<8x1xf32>
    %cst_37 = arith.constant 3.200000e+01 : f32
    %107 = vector.broadcast %cst_37 : f32 to vector<8x1xf32>
    %108 = arith.divf %106, %107 : vector<8x1xf32>
    %109 = vector.broadcast %108 : vector<8x1xf32> to vector<8x32xf32>
    %110 = arith.subf %100, %109 : vector<8x32xf32>
    %111 = arith.mulf %110, %110 : vector<8x32xf32>
    %cst_38 = arith.constant dense<0.000000e+00> : vector<8xf32>
    %112 = vector.multi_reduction <add>, %111, %cst_38 [1] : vector<8x32xf32> to vector<8xf32>
    %113 = vector.shape_cast %112 : vector<8xf32> to vector<8x1xf32>
    %cst_39 = arith.constant 3.200000e+01 : f32
    %114 = vector.broadcast %cst_39 : f32 to vector<8x1xf32>
    %115 = arith.divf %113, %114 : vector<8x1xf32>
    %116 = vector.broadcast %108 : vector<8x1xf32> to vector<8x32xf32>
    %117 = arith.subf %100, %116 : vector<8x32xf32>
    %cst_40 = arith.constant 9.99999974E-6 : f32
    %118 = vector.broadcast %cst_40 : f32 to vector<8x1xf32>
    %119 = arith.addf %115, %118 : vector<8x1xf32>
    %120 = math.rsqrt %119 : vector<8x1xf32>
    %121 = vector.broadcast %120 : vector<8x1xf32> to vector<8x32xf32>
    %122 = arith.mulf %117, %121 : vector<8x32xf32>
    %123 = vector.broadcast %102 : vector<1x32xf32> to vector<8x32xf32>
    %124 = arith.mulf %122, %123 : vector<8x32xf32>
    %125 = vector.broadcast %104 : vector<1x32xf32> to vector<8x32xf32>
    %126 = arith.addf %124, %125 : vector<8x32xf32>
    %c0_41 = arith.constant 0 : index
    %c0_42 = arith.constant 0 : index
    %c0_43 = arith.constant 0 : index
    %127 = vector.load %arg14[%c0_41, %c0_42, %c0_43] : memref<1x64x32xbf16, #tpu.memory_space<vmem>>, vector<1x64x32xbf16>
    %128 = vector.shape_cast %127 : vector<1x64x32xbf16> to vector<64x32xbf16>
    %129 = arith.truncf %126 : vector<8x32xf32> to vector<8x32xbf16>
    %cst_44 = arith.constant dense<0.000000e+00> : vector<8x64xf32>
    %130 = tpu.matmul %129, %128, %cst_44 {dimension_numbers = #tpu.dot_dimension_numbers<[1], [1], [0], [0], [0, 0, 1, 0], [], []>} : vector<8x32xbf16>, vector<64x32xbf16>, vector<8x64xf32> -> vector<8x64xf32>
    %c0_45 = arith.constant 0 : index
    %c0_46 = arith.constant 0 : index
    %c0_47 = arith.constant 0 : index
    %131 = vector.load %arg15[%c0_45, %c0_46, %c0_47] : memref<1x1x64xf32, #tpu.memory_space<vmem>>, vector<1x1x64xf32>
    %132 = vector.shape_cast %131 : vector<1x1x64xf32> to vector<1x64xf32>
    %133 = vector.broadcast %132 : vector<1x64xf32> to vector<8x64xf32>
    %134 = arith.addf %130, %133 : vector<8x64xf32>
    %cst_48 = arith.constant 0.000000e+00 : f32
    %135 = vector.broadcast %cst_48 : f32 to vector<8x64xf32>
    %136 = arith.maximumf %134, %135 : vector<8x64xf32>
    %c0_49 = arith.constant 0 : index
    %c0_50 = arith.constant 0 : index
    %c0_51 = arith.constant 0 : index
    %137 = vector.load %arg16[%c0_49, %c0_50, %c0_51] : memref<1x32x64xbf16, #tpu.memory_space<vmem>>, vector<1x32x64xbf16>
    %138 = vector.shape_cast %137 : vector<1x32x64xbf16> to vector<32x64xbf16>
    %139 = arith.truncf %136 : vector<8x64xf32> to vector<8x64xbf16>
    %cst_52 = arith.constant dense<0.000000e+00> : vector<8x32xf32>
    %140 = tpu.matmul %139, %138, %cst_52 {dimension_numbers = #tpu.dot_dimension_numbers<[1], [1], [0], [0], [0, 0, 1, 0], [], []>} : vector<8x64xbf16>, vector<32x64xbf16>, vector<8x32xf32> -> vector<8x32xf32>
    %141 = arith.addf %100, %140 : vector<8x32xf32>
    %c0_53 = arith.constant 0 : index
    %c0_54 = arith.constant 0 : index
    %c0_55 = arith.constant 0 : index
    %142 = vector.load %arg17[%c0_53, %c0_54, %c0_55] : memref<1x1x32xf32, #tpu.memory_space<vmem>>, vector<1x1x32xf32>
    %143 = vector.shape_cast %142 : vector<1x1x32xf32> to vector<1x32xf32>
    %144 = vector.broadcast %143 : vector<1x32xf32> to vector<8x32xf32>
    %145 = arith.addf %141, %144 : vector<8x32xf32>
    %c0_56 = arith.constant 0 : index
    %c0_57 = arith.constant 0 : index
    %146 = vector.load %arg21[%c0_56, %c0_57] : memref<8x32xf32, #tpu.memory_space<vmem>>, vector<8x32xf32>
    tpu.vector_store %arg21[%c0_56, %c0_57], %145 {strides = array<i32>} : memref<8x32xf32, #tpu.memory_space<vmem>>, vector<8x32xf32>,
    %c1_i32 = arith.constant 1 : i32
    %147 = arith.cmpi eq, %arg1, %c1_i32 : i32
    %148 = arith.extui %147 : i1 to i32
    %c0_i32_58 = arith.constant 0 : i32
    %149 = arith.cmpi ne, %148, %c0_i32_58 : i32
    scf.if %149 {
      %c0_59 = arith.constant 0 : index
      %c0_60 = arith.constant 0 : index
      %150 = vector.load %arg18[%c0_59, %c0_60] : memref<1x32xf32, #tpu.memory_space<vmem>>, vector<1x32xf32>
      %c0_61 = arith.constant 0 : index
      %c0_62 = arith.constant 0 : index
      %151 = vector.load %arg19[%c0_61, %c0_62] : memref<1x32xf32, #tpu.memory_space<vmem>>, vector<1x32xf32>
      %cst_63 = arith.constant dense<0.000000e+00> : vector<8xf32>
      %152 = vector.multi_reduction <add>, %145, %cst_63 [1] : vector<8x32xf32> to vector<8xf32>
      %153 = vector.shape_cast %152 : vector<8xf32> to vector<8x1xf32>
      %cst_64 = arith.constant 3.200000e+01 : f32
      %154 = vector.broadcast %cst_64 : f32 to vector<8x1xf32>
      %155 = arith.divf %153, %154 : vector<8x1xf32>
      %156 = vector.broadcast %155 : vector<8x1xf32> to vector<8x32xf32>
      %157 = arith.subf %145, %156 : vector<8x32xf32>
      %158 = arith.mulf %157, %157 : vector<8x32xf32>
      %cst_65 = arith.constant dense<0.000000e+00> : vector<8xf32>
      %159 = vector.multi_reduction <add>, %158, %cst_65 [1] : vector<8x32xf32> to vector<8xf32>
      %160 = vector.shape_cast %159 : vector<8xf32> to vector<8x1xf32>
      %cst_66 = arith.constant 3.200000e+01 : f32
      %161 = vector.broadcast %cst_66 : f32 to vector<8x1xf32>
      %162 = arith.divf %160, %161 : vector<8x1xf32>
      %163 = vector.broadcast %155 : vector<8x1xf32> to vector<8x32xf32>
      %164 = arith.subf %145, %163 : vector<8x32xf32>
      %cst_67 = arith.constant 9.99999974E-6 : f32
      %165 = vector.broadcast %cst_67 : f32 to vector<8x1xf32>
      %166 = arith.addf %162, %165 : vector<8x1xf32>
      %167 = math.rsqrt %166 : vector<8x1xf32>
      %168 = vector.broadcast %167 : vector<8x1xf32> to vector<8x32xf32>
      %169 = arith.mulf %164, %168 : vector<8x32xf32>
      %170 = vector.broadcast %150 : vector<1x32xf32> to vector<8x32xf32>
      %171 = arith.mulf %169, %170 : vector<8x32xf32>
      %172 = vector.broadcast %151 : vector<1x32xf32> to vector<8x32xf32>
      %173 = arith.addf %171, %172 : vector<8x32xf32>
      %c0_68 = arith.constant 0 : index
      %c0_69 = arith.constant 0 : index
      %c0_70 = arith.constant 0 : index
      %174 = vector.load %arg20[%c0_68, %c0_69, %c0_70] : memref<1x8x32xf32, #tpu.memory_space<vmem>>, vector<1x8x32xf32>
      %175 = vector.shape_cast %174 : vector<1x8x32xf32> to vector<8x32xf32>
      %176 = vector.shape_cast %173 : vector<8x32xf32> to vector<1x8x32xf32>
      tpu.vector_store %arg20[%c0_68, %c0_69, %c0_70], %176 {strides = array<i32>} : memref<1x8x32xf32, #tpu.memory_space<vmem>>, vector<1x8x32xf32>,
    } else {
    }
    return
  }
  func.func @transform_0(%arg0: i32, %arg1: i32) -> (i32, i32, i32) {
    %c0_i32 = arith.constant 0 : i32
    %c0_i32_0 = arith.constant 0 : i32
    %c0_i32_1 = arith.constant 0 : i32
    return %arg0, %c0_i32, %c0_i32_0 : i32, i32, i32
  }
  func.func @transform_1(%arg0: i32, %arg1: i32) -> (i32, i32) {
    %c0_i32 = arith.constant 0 : i32
    %c0_i32_0 = arith.constant 0 : i32
    %c0_i32_1 = arith.constant 0 : i32
    return %c0_i32, %c0_i32_0 : i32, i32
  }
  func.func @transform_2(%arg0: i32, %arg1: i32) -> (i32, i32) {
    %c0_i32 = arith.constant 0 : i32
    %c0_i32_0 = arith.constant 0 : i32
    %c0_i32_1 = arith.constant 0 : i32
    return %c0_i32, %c0_i32_0 : i32, i32
  }
  func.func @transform_3(%arg0: i32, %arg1: i32) -> (i32, i32) {
    %c0_i32 = arith.constant 0 : i32
    %c0_i32_0 = arith.constant 0 : i32
    %c0_i32_1 = arith.constant 0 : i32
    return %c0_i32, %c0_i32_0 : i32, i32
  }
  func.func @transform_4(%arg0: i32, %arg1: i32) -> (i32, i32) {
    %c0_i32 = arith.constant 0 : i32
    %c0_i32_0 = arith.constant 0 : i32
    %c0_i32_1 = arith.constant 0 : i32
    return %c0_i32, %c0_i32_0 : i32, i32
  }
  func.func @transform_5(%arg0: i32, %arg1: i32) -> (i32, i32, i32) {
    %c0_i32 = arith.constant 0 : i32
    %c0_i32_0 = arith.constant 0 : i32
    %c0_i32_1 = arith.constant 0 : i32
    return %arg1, %c0_i32, %c0_i32_0 : i32, i32, i32
  }
  func.func @transform_6(%arg0: i32, %arg1: i32) -> (i32, i32, i32) {
    %c0_i32 = arith.constant 0 : i32
    %c0_i32_0 = arith.constant 0 : i32
    %c0_i32_1 = arith.constant 0 : i32
    return %arg1, %c0_i32, %c0_i32_0 : i32, i32, i32
  }
  func.func @transform_7(%arg0: i32, %arg1: i32) -> (i32, i32, i32) {
    %c0_i32 = arith.constant 0 : i32
    %c0_i32_0 = arith.constant 0 : i32
    %c0_i32_1 = arith.constant 0 : i32
    return %arg1, %c0_i32, %c0_i32_0 : i32, i32, i32
  }
  func.func @transform_8(%arg0: i32, %arg1: i32) -> (i32, i32, i32) {
    %c0_i32 = arith.constant 0 : i32
    %c0_i32_0 = arith.constant 0 : i32
    %c0_i32_1 = arith.constant 0 : i32
    return %arg1, %c0_i32, %c0_i32_0 : i32, i32, i32
  }
  func.func @transform_9(%arg0: i32, %arg1: i32) -> (i32, i32, i32) {
    %c0_i32 = arith.constant 0 : i32
    %c0_i32_0 = arith.constant 0 : i32
    %c0_i32_1 = arith.constant 0 : i32
    return %arg1, %c0_i32, %c0_i32_0 : i32, i32, i32
  }
  func.func @transform_10(%arg0: i32, %arg1: i32) -> (i32, i32, i32) {
    %c0_i32 = arith.constant 0 : i32
    %c0_i32_0 = arith.constant 0 : i32
    %c0_i32_1 = arith.constant 0 : i32
    return %arg1, %c0_i32, %c0_i32_0 : i32, i32, i32
  }
  func.func @transform_11(%arg0: i32, %arg1: i32) -> (i32, i32, i32) {
    %c0_i32 = arith.constant 0 : i32
    %c0_i32_0 = arith.constant 0 : i32
    %c0_i32_1 = arith.constant 0 : i32
    return %arg1, %c0_i32, %c0_i32_0 : i32, i32, i32
  }
  func.func @transform_12(%arg0: i32, %arg1: i32) -> (i32, i32, i32) {
    %c0_i32 = arith.constant 0 : i32
    %c0_i32_0 = arith.constant 0 : i32
    %c0_i32_1 = arith.constant 0 : i32
    return %arg1, %c0_i32, %c0_i32_0 : i32, i32, i32
  }
  func.func @transform_13(%arg0: i32, %arg1: i32) -> (i32, i32, i32) {
    %c0_i32 = arith.constant 0 : i32
    %c0_i32_0 = arith.constant 0 : i32
    %c0_i32_1 = arith.constant 0 : i32
    return %arg1, %c0_i32, %c0_i32_0 : i32, i32, i32
  }
  func.func @transform_14(%arg0: i32, %arg1: i32) -> (i32, i32, i32) {
    %c0_i32 = arith.constant 0 : i32
    %c0_i32_0 = arith.constant 0 : i32
    %c0_i32_1 = arith.constant 0 : i32
    return %arg1, %c0_i32, %c0_i32_0 : i32, i32, i32
  }
  func.func @transform_15(%arg0: i32, %arg1: i32) -> (i32, i32, i32) {
    %c0_i32 = arith.constant 0 : i32
    %c0_i32_0 = arith.constant 0 : i32
    %c0_i32_1 = arith.constant 0 : i32
    return %arg1, %c0_i32, %c0_i32_0 : i32, i32, i32
  }
  func.func @transform_16(%arg0: i32, %arg1: i32) -> (i32, i32) {
    %c0_i32 = arith.constant 0 : i32
    %c0_i32_0 = arith.constant 0 : i32
    %c0_i32_1 = arith.constant 0 : i32
    return %c0_i32, %c0_i32_0 : i32, i32
  }
  func.func @transform_17(%arg0: i32, %arg1: i32) -> (i32, i32) {
    %c0_i32 = arith.constant 0 : i32
    %c0_i32_0 = arith.constant 0 : i32
    %c0_i32_1 = arith.constant 0 : i32
    return %c0_i32, %c0_i32_0 : i32, i32
  }
  func.func @transform_18(%arg0: i32, %arg1: i32) -> (i32, i32, i32) {
    %c0_i32 = arith.constant 0 : i32
    %c0_i32_0 = arith.constant 0 : i32
    %c0_i32_1 = arith.constant 0 : i32
    return %arg0, %c0_i32, %c0_i32_0 : i32, i32, i32
  }
}

</mosaic_0001>

<llo_original>
// kernel: tpu_custom_call.1
$region0: #{tpu_custom_call.1}
  #allocation0 [shape = 'u32[]', space=smem, size = 0x4, offset = 0x4, fixed_abs, tag = 'smem constant byte address 0x4 - core index']
  #allocation1 [shape = 'u32[144,128]{1,0:T(1,128)}', space=vmem, size = 0x12000, scoped, tag = 'internal scratch']
  #allocation2 [shape = 'f32[8,32]{1,0:T(8,128)}', space=vmem, size = 0x1000, scoped, tag = 'scratch operand']
  %s0 = inlined_call_operand.vmem [shape: f32[2,8,12], index: 0, kind: input, shape index: {}]
  %s1 = inlined_call_operand.vmem [shape: bf16[32,12], index: 1, kind: input, shape index: {}]
  %s2 = inlined_call_operand.vmem [shape: f32[1,32], index: 2, kind: input, shape index: {}]
  %s3 = inlined_call_operand.vmem [shape: f32[8,32], index: 3, kind: input, shape index: {}]
  %s4 = inlined_call_operand.vmem [shape: f32[8,8], index: 4, kind: input, shape index: {}]
  %s5 = inlined_call_operand.vmem [shape: f32[2,1,32], index: 5, kind: input, shape index: {}]
  %s6 = inlined_call_operand.vmem [shape: f32[2,1,32], index: 6, kind: input, shape index: {}]
  %s7 = inlined_call_operand.vmem [shape: bf16[2,96,32], index: 7, kind: input, shape index: {}]
  %s8 = inlined_call_operand.vmem [shape: bf16[2,32,32], index: 8, kind: input, shape index: {}]
  %s9 = inlined_call_operand.vmem [shape: f32[2,1,32], index: 9, kind: input, shape index: {}]
  %s10 = inlined_call_operand.vmem [shape: f32[2,1,32], index: 10, kind: input, shape index: {}]
  %s11 = inlined_call_operand.vmem [shape: f32[2,1,32], index: 11, kind: input, shape index: {}]
  %s12 = inlined_call_operand.vmem [shape: bf16[2,64,32], index: 12, kind: input, shape index: {}]
  %s13 = inlined_call_operand.vmem [shape: f32[2,1,64], index: 13, kind: input, shape index: {}]
  %s14 = inlined_call_operand.vmem [shape: bf16[2,32,64], index: 14, kind: input, shape index: {}]
  %s15 = inlined_call_operand.vmem [shape: f32[2,1,32], index: 15, kind: input, shape index: {}]
  %s16 = inlined_call_operand.vmem [shape: f32[1,32], index: 16, kind: input, shape index: {}]
  %s17 = inlined_call_operand.vmem [shape: f32[1,32], index: 17, kind: input, shape index: {}]
  %s18 = inlined_call_operand.hbm [shape: f32[2,8,32], index: 18, kind: output, shape index: {}]
  %s19 = sld [smem:[#allocation0]]
  $region113: #{tpu_custom_call.1} parent=0
    _
  %s21 = ssub.s32 1, %s19
  %s22 = scalar_select 0, %s21, %s19
  $region1: #{tpu_custom_call.1} parent=0
    #allocation3 [shape = 'u8[8192]{0}', space=vmem, size = 0x2000, scoped, tag = 'output window, operand 0']
    #allocation4 [shape = 's32[2]{0}', space=sflag, size = 0x8, scoped, tag = 'scoped memory for tpu_custom_call.1']
    %23 = vsyncpa [#allocation4], 0
    %s24 = scalar_lea.sflag [#allocation4], 1
    %25 = vsyncpa %s24, 0
    loop: start=0, step=1, limit=6
    $region2: #{tpu_custom_call.1} parent=1 // loop_pre_header
      _
    $region3: #{tpu_custom_call.1} parent=1 // loop_header
      %s27 = sphi 0, %s31
      %p28 = scmp.ge.s32.totalorder %s27, 6
      %s34 = sphi 0, %s46
      %s35 = sphi 0, %s42
      %s36 = sphi 0, %s34
      %s37 = sphi 0, %s35
      %s38 = sphi 0, %s36
      %s39 = sphi 0, %s37
      %s49 = sphi 0, %s51
      %s52 = sphi 0, %s49
      %s53 = sphi 0, %s52
      %s69 = sphi 0, %s53
      %s73 = sphi 0, %s73
      %s75 = sphi 0, %s73
      %s76 = sphi 0, %s75
      %s90 = sphi 0, %s76
      %s94 = sphi 0, %s94
      %s96 = sphi 0, %s94
      %s97 = sphi 0, %s96
      %s111 = sphi 0, %s97
      %s115 = sphi 0, %s115
      %s117 = sphi 0, %s115
      %s118 = sphi 0, %s117
      %s132 = sphi 0, %s118
      %s136 = sphi 0, %s136
      %s138 = sphi 0, %s136
      %s139 = sphi 0, %s138
      %s153 = sphi 0, %s139
      %s159 = sphi 0, %s161
      %s162 = sphi 0, %s159
      %s163 = sphi 0, %s162
      %s179 = sphi 0, %s163
      %s185 = sphi 0, %s187
      %s188 = sphi 0, %s185
      %s189 = sphi 0, %s188
      %s205 = sphi 0, %s189
      %s211 = sphi 0, %s213
      %s214 = sphi 0, %s211
      %s215 = sphi 0, %s214
      %s231 = sphi 0, %s215
      %s237 = sphi 0, %s239
      %s240 = sphi 0, %s237
      %s241 = sphi 0, %s240
      %s257 = sphi 0, %s241
      %s263 = sphi 0, %s265
      %s266 = sphi 0, %s263
      %s267 = sphi 0, %s266
      %s283 = sphi 0, %s267
      %s289 = sphi 0, %s291
      %s292 = sphi 0, %s289
      %s293 = sphi 0, %s292
      %s309 = sphi 0, %s293
      %s315 = sphi 0, %s317
      %s318 = sphi 0, %s315
      %s319 = sphi 0, %s318
      %s335 = sphi 0, %s319
      %s341 = sphi 0, %s343
      %s344 = sphi 0, %s341
      %s345 = sphi 0, %s344
      %s361 = sphi 0, %s345
      %s367 = sphi 0, %s369
      %s370 = sphi 0, %s367
      %s371 = sphi 0, %s370
      %s387 = sphi 0, %s371
      %s393 = sphi 0, %s395
      %s396 = sphi 0, %s393
      %s397 = sphi 0, %s396
      %s413 = sphi 0, %s397
      %s419 = sphi 0, %s421
      %s422 = sphi 0, %s419
      %s423 = sphi 0, %s422
      %s439 = sphi 0, %s423
      %s443 = sphi 0, %s443
      %s445 = sphi 0, %s443
      %s446 = sphi 0, %s445
      %s460 = sphi 0, %s446
      %s464 = sphi 0, %s464
      %s466 = sphi 0, %s464
      %s467 = sphi 0, %s466
      %s481 = sphi 0, %s467
      %s487 = sphi 0, %s489
      %s490 = sphi 0, %s487
      %s491 = sphi 0, %s490
      %s507 = sphi 0, %s491
    $region4: #{tpu_custom_call.1} parent=1 // loop_header_branch
      %30 = sbr.rel (%p28) target = $region8
    $region5: #{tpu_custom_call.1} parent=1 // loop_body
      %s32 = ssub.s32 %s27, 1
      %s33 = ssub.s32 %s27, 2
      %s40 = sadd.s32 1, %s35
      %p41 = scmp.ge.s32.totalorder %s40, 2
      %s42 = scalar_select %p41, 0, %s40
      %s43 = sadd.s32 1, %s34
      %s44 = scalar_select %p41, %s43, %s34
      %p45 = scmp.ge.s32.totalorder %s44, 2
      %s46 = scalar_select %p45, 0, %s44
      %s47 = ssub.s32 %s34, %s46
      %p48 = scmp.eq.s32.totalorder %s47, 0
      %s50 = sadd.s32 %s49, 1
      %s51 = scalar_select %p48, %s49, %s50
      %p54 = pneg %p48
      %p55 = scmp.eq.s32.totalorder %s27, 3
      %p56 = por %p54, %p55
      %p57 = scmp.ne.s32.totalorder %s49, %s52
      %p58 = scmp.eq.s32.totalorder %s27, 0
      %p59 = por %p57, %p58
      %p60 = scmp.ne.s32.totalorder %s49, %s52
      %p61 = scmp.eq.s32.totalorder %s32, 3
      %p62 = por %p60, %p61
      %p63 = scmp.ne.s32.totalorder %s52, %s53
      %p64 = scmp.eq.s32.totalorder %s32, 0
      %p65 = por %p63, %p64
      %p66 = scmp.ne.s32.totalorder %s52, %s53
      %p67 = scmp.eq.s32.totalorder %s33, 3
      %p68 = por %p66, %p67
      %p70 = scmp.ne.s32.totalorder %s53, %s69
      %p71 = scmp.eq.s32.totalorder %s33, 0
      %p72 = por %p70, %p71
      %s74 = sadd.s32 %s73, 1
      %p77 = scmp.eq.s32.totalorder %s27, 3
      %p78 = scmp.ne.s32.totalorder %s73, %s75
      %p79 = scmp.eq.s32.totalorder %s27, 0
      %p80 = por %p78, %p79
      %p81 = scmp.ne.s32.totalorder %s73, %s75
      %p82 = scmp.eq.s32.totalorder %s32, 3
      %p83 = por %p81, %p82
      %p84 = scmp.ne.s32.totalorder %s75, %s76
      %p85 = scmp.eq.s32.totalorder %s32, 0
      %p86 = por %p84, %p85
      %p87 = scmp.ne.s32.totalorder %s75, %s76
      %p88 = scmp.eq.s32.totalorder %s33, 3
      %p89 = por %p87, %p88
      %p91 = scmp.ne.s32.totalorder %s76, %s90
      %p92 = scmp.eq.s32.totalorder %s33, 0
      %p93 = por %p91, %p92
      %s95 = sadd.s32 %s94, 1
      %p98 = scmp.eq.s32.totalorder %s27, 3
      %p99 = scmp.ne.s32.totalorder %s94, %s96
      %p100 = scmp.eq.s32.totalorder %s27, 0
      %p101 = por %p99, %p100
      %p102 = scmp.ne.s32.totalorder %s94, %s96
      %p103 = scmp.eq.s32.totalorder %s32, 3
      %p104 = por %p102, %p103
      %p105 = scmp.ne.s32.totalorder %s96, %s97
      %p106 = scmp.eq.s32.totalorder %s32, 0
      %p107 = por %p105, %p106
      %p108 = scmp.ne.s32.totalorder %s96, %s97
      %p109 = scmp.eq.s32.totalorder %s33, 3
      %p110 = por %p108, %p109
      %p112 = scmp.ne.s32.totalorder %s97, %s111
      %p113 = scmp.eq.s32.totalorder %s33, 0
      %p114 = por %p112, %p113
      %s116 = sadd.s32 %s115, 1
      %p119 = scmp.eq.s32.totalorder %s27, 3
      %p120 = scmp.ne.s32.totalorder %s115, %s117
      %p121 = scmp.eq.s32.totalorder %s27, 0
      %p122 = por %p120, %p121
      %p123 = scmp.ne.s32.totalorder %s115, %s117
      %p124 = scmp.eq.s32.totalorder %s32, 3
      %p125 = por %p123, %p124
      %p126 = scmp.ne.s32.totalorder %s117, %s118
      %p127 = scmp.eq.s32.totalorder %s32, 0
      %p128 = por %p126, %p127
      %p129 = scmp.ne.s32.totalorder %s117, %s118
      %p130 = scmp.eq.s32.totalorder %s33, 3
      %p131 = por %p129, %p130
      %p133 = scmp.ne.s32.totalorder %s118, %s132
      %p134 = scmp.eq.s32.totalorder %s33, 0
      %p135 = por %p133, %p134
      %s137 = sadd.s32 %s136, 1
      %p140 = scmp.eq.s32.totalorder %s27, 3
      %p141 = scmp.ne.s32.totalorder %s136, %s138
      %p142 = scmp.eq.s32.totalorder %s27, 0
      %p143 = por %p141, %p142
      %p144 = scmp.ne.s32.totalorder %s136, %s138
      %p145 = scmp.eq.s32.totalorder %s32, 3
      %p146 = por %p144, %p145
      %p147 = scmp.ne.s32.totalorder %s138, %s139
      %p148 = scmp.eq.s32.totalorder %s32, 0
      %p149 = por %p147, %p148
      %p150 = scmp.ne.s32.totalorder %s138, %s139
      %p151 = scmp.eq.s32.totalorder %s33, 3
      %p152 = por %p150, %p151
      %p154 = scmp.ne.s32.totalorder %s139, %s153
      %p155 = scmp.eq.s32.totalorder %s33, 0
      %p156 = por %p154, %p155
      %s157 = ssub.s32 %s35, %s42
      %p158 = scmp.eq.s32.totalorder %s157, 0
      %s160 = sadd.s32 %s159, 1
      %s161 = scalar_select %p158, %s159, %s160
      %p164 = pneg %p158
      %p165 = scmp.eq.s32.totalorder %s27, 3
      %p166 = por %p164, %p165
      %p167 = scmp.ne.s32.totalorder %s159, %s162
      %p168 = scmp.eq.s32.totalorder %s27, 0
      %p169 = por %p167, %p168
      %p170 = scmp.ne.s32.totalorder %s159, %s162
      %p171 = scmp.eq.s32.totalorder %s32, 3
      %p172 = por %p170, %p171
      %p173 = scmp.ne.s32.totalorder %s162, %s163
      %p174 = scmp.eq.s32.totalorder %s32, 0
      %p175 = por %p173, %p174
      %p176 = scmp.ne.s32.totalorder %s162, %s163
      %p177 = scmp.eq.s32.totalorder %s33, 3
      %p178 = por %p176, %p177
      %p180 = scmp.ne.s32.totalorder %s163, %s179
      %p181 = scmp.eq.s32.totalorder %s33, 0
      %p182 = por %p180, %p181
      %s183 = ssub.s32 %s35, %s42
      %p184 = scmp.eq.s32.totalorder %s183, 0
      %s186 = sadd.s32 %s185, 1
      %s187 = scalar_select %p184, %s185, %s186
      %p190 = pneg %p184
      %p191 = scmp.eq.s32.totalorder %s27, 3
      %p192 = por %p190, %p191
      %p193 = scmp.ne.s32.totalorder %s185, %s188
      %p194 = scmp.eq.s32.totalorder %s27, 0
      %p195 = por %p193, %p194
      %p196 = scmp.ne.s32.totalorder %s185, %s188
      %p197 = scmp.eq.s32.totalorder %s32, 3
      %p198 = por %p196, %p197
      %p199 = scmp.ne.s32.totalorder %s188, %s189
      %p200 = scmp.eq.s32.totalorder %s32, 0
      %p201 = por %p199, %p200
      %p202 = scmp.ne.s32.totalorder %s188, %s189
      %p203 = scmp.eq.s32.totalorder %s33, 3
      %p204 = por %p202, %p203
      %p206 = scmp.ne.s32.totalorder %s189, %s205
      %p207 = scmp.eq.s32.totalorder %s33, 0
      %p208 = por %p206, %p207
      %s209 = ssub.s32 %s35, %s42
      %p210 = scmp.eq.s32.totalorder %s209, 0
      %s212 = sadd.s32 %s211, 1
      %s213 = scalar_select %p210, %s211, %s212
      %p216 = pneg %p210
      %p217 = scmp.eq.s32.totalorder %s27, 3
      %p218 = por %p216, %p217
      %p219 = scmp.ne.s32.totalorder %s211, %s214
      %p220 = scmp.eq.s32.totalorder %s27, 0
      %p221 = por %p219, %p220
      %p222 = scmp.ne.s32.totalorder %s211, %s214
      %p223 = scmp.eq.s32.totalorder %s32, 3
      %p224 = por %p222, %p223
      %p225 = scmp.ne.s32.totalorder %s214, %s215
      %p226 = scmp.eq.s32.totalorder %s32, 0
      %p227 = por %p225, %p226
      %p228 = scmp.ne.s32.totalorder %s214, %s215
      %p229 = scmp.eq.s32.totalorder %s33, 3
      %p230 = por %p228, %p229
      %p232 = scmp.ne.s32.totalorder %s215, %s231
      %p233 = scmp.eq.s32.totalorder %s33, 0
      %p234 = por %p232, %p233
      %s235 = ssub.s32 %s35, %s42
      %p236 = scmp.eq.s32.totalorder %s235, 0
      %s238 = sadd.s32 %s237, 1
      %s239 = scalar_select %p236, %s237, %s238
      %p242 = pneg %p236
      %p243 = scmp.eq.s32.totalorder %s27, 3
      %p244 = por %p242, %p243
      %p245 = scmp.ne.s32.totalorder %s237, %s240
      %p246 = scmp.eq.s32.totalorder %s27, 0
      %p247 = por %p245, %p246
      %p248 = scmp.ne.s32.totalorder %s237, %s240
      %p249 = scmp.eq.s32.totalorder %s32, 3
      %p250 = por %p248, %p249
      %p251 = scmp.ne.s32.totalorder %s240, %s241
      %p252 = scmp.eq.s32.totalorder %s32, 0
      %p253 = por %p251, %p252
      %p254 = scmp.ne.s32.totalorder %s240, %s241
      %p255 = scmp.eq.s32.totalorder %s33, 3
      %p256 = por %p254, %p255
      %p258 = scmp.ne.s32.totalorder %s241, %s257
      %p259 = scmp.eq.s32.totalorder %s33, 0
      %p260 = por %p258, %p259
      %s261 = ssub.s32 %s35, %s42
      %p262 = scmp.eq.s32.totalorder %s261, 0
      %s264 = sadd.s32 %s263, 1
      %s265 = scalar_select %p262, %s263, %s264
      %p268 = pneg %p262
      %p269 = scmp.eq.s32.totalorder %s27, 3
      %p270 = por %p268, %p269
      %p271 = scmp.ne.s32.totalorder %s263, %s266
      %p272 = scmp.eq.s32.totalorder %s27, 0
      %p273 = por %p271, %p272
      %p274 = scmp.ne.s32.totalorder %s263, %s266
      %p275 = scmp.eq.s32.totalorder %s32, 3
      %p276 = por %p274, %p275
      %p277 = scmp.ne.s32.totalorder %s266, %s267
      %p278 = scmp.eq.s32.totalorder %s32, 0
      %p279 = por %p277, %p278
      %p280 = scmp.ne.s32.totalorder %s266, %s267
      %p281 = scmp.eq.s32.totalorder %s33, 3
      %p282 = por %p280, %p281
      %p284 = scmp.ne.s32.totalorder %s267, %s283
      %p285 = scmp.eq.s32.totalorder %s33, 0
      %p286 = por %p284, %p285
      %s287 = ssub.s32 %s35, %s42
      %p288 = scmp.eq.s32.totalorder %s287, 0
      %s290 = sadd.s32 %s289, 1
      %s291 = scalar_select %p288, %s289, %s290
      %p294 = pneg %p288
      %p295 = scmp.eq.s32.totalorder %s27, 3
      %p296 = por %p294, %p295
      %p297 = scmp.ne.s32.totalorder %s289, %s292
      %p298 = scmp.eq.s32.totalorder %s27, 0
      %p299 = por %p297, %p298
      %p300 = scmp.ne.s32.totalorder %s289, %s292
      %p301 = scmp.eq.s32.totalorder %s32, 3
      %p302 = por %p300, %p301
      %p303 = scmp.ne.s32.totalorder %s292, %s293
      %p304 = scmp.eq.s32.totalorder %s32, 0
      %p305 = por %p303, %p304
      %p306 = scmp.ne.s32.totalorder %s292, %s293
      %p307 = scmp.eq.s32.totalorder %s33, 3
      %p308 = por %p306, %p307
      %p310 = scmp.ne.s32.totalorder %s293, %s309
      %p311 = scmp.eq.s32.totalorder %s33, 0
      %p312 = por %p310, %p311
      %s313 = ssub.s32 %s35, %s42
      %p314 = scmp.eq.s32.totalorder %s313, 0
      %s316 = sadd.s32 %s315, 1
      %s317 = scalar_select %p314, %s315, %s316
      %p320 = pneg %p314
      %p321 = scmp.eq.s32.totalorder %s27, 3
      %p322 = por %p320, %p321
      %p323 = scmp.ne.s32.totalorder %s315, %s318
      %p324 = scmp.eq.s32.totalorder %s27, 0
      %p325 = por %p323, %p324
      %p326 = scmp.ne.s32.totalorder %s315, %s318
      %p327 = scmp.eq.s32.totalorder %s32, 3
      %p328 = por %p326, %p327
      %p329 = scmp.ne.s32.totalorder %s318, %s319
      %p330 = scmp.eq.s32.totalorder %s32, 0
      %p331 = por %p329, %p330
      %p332 = scmp.ne.s32.totalorder %s318, %s319
      %p333 = scmp.eq.s32.totalorder %s33, 3
      %p334 = por %p332, %p333
      %p336 = scmp.ne.s32.totalorder %s319, %s335
      %p337 = scmp.eq.s32.totalorder %s33, 0
      %p338 = por %p336, %p337
      %s339 = ssub.s32 %s35, %s42
      %p340 = scmp.eq.s32.totalorder %s339, 0
      %s342 = sadd.s32 %s341, 1
      %s343 = scalar_select %p340, %s341, %s342
      %p346 = pneg %p340
      %p347 = scmp.eq.s32.totalorder %s27, 3
      %p348 = por %p346, %p347
      %p349 = scmp.ne.s32.totalorder %s341, %s344
      %p350 = scmp.eq.s32.totalorder %s27, 0
      %p351 = por %p349, %p350
      %p352 = scmp.ne.s32.totalorder %s341, %s344
      %p353 = scmp.eq.s32.totalorder %s32, 3
      %p354 = por %p352, %p353
      %p355 = scmp.ne.s32.totalorder %s344, %s345
      %p356 = scmp.eq.s32.totalorder %s32, 0
      %p357 = por %p355, %p356
      %p358 = scmp.ne.s32.totalorder %s344, %s345
      %p359 = scmp.eq.s32.totalorder %s33, 3
      %p360 = por %p358, %p359
      %p362 = scmp.ne.s32.totalorder %s345, %s361
      %p363 = scmp.eq.s32.totalorder %s33, 0
      %p364 = por %p362, %p363
      %s365 = ssub.s32 %s35, %s42
      %p366 = scmp.eq.s32.totalorder %s365, 0
      %s368 = sadd.s32 %s367, 1
      %s369 = scalar_select %p366, %s367, %s368
      %p372 = pneg %p366
      %p373 = scmp.eq.s32.totalorder %s27, 3
      %p374 = por %p372, %p373
      %p375 = scmp.ne.s32.totalorder %s367, %s370
      %p376 = scmp.eq.s32.totalorder %s27, 0
      %p377 = por %p375, %p376
      %p378 = scmp.ne.s32.totalorder %s367, %s370
      %p379 = scmp.eq.s32.totalorder %s32, 3
      %p380 = por %p378, %p379
      %p381 = scmp.ne.s32.totalorder %s370, %s371
      %p382 = scmp.eq.s32.totalorder %s32, 0
      %p383 = por %p381, %p382
      %p384 = scmp.ne.s32.totalorder %s370, %s371
      %p385 = scmp.eq.s32.totalorder %s33, 3
      %p386 = por %p384, %p385
      %p388 = scmp.ne.s32.totalorder %s371, %s387
      %p389 = scmp.eq.s32.totalorder %s33, 0
      %p390 = por %p388, %p389
      %s391 = ssub.s32 %s35, %s42
      %p392 = scmp.eq.s32.totalorder %s391, 0
      %s394 = sadd.s32 %s393, 1
      %s395 = scalar_select %p392, %s393, %s394
      %p398 = pneg %p392
      %p399 = scmp.eq.s32.totalorder %s27, 3
      %p400 = por %p398, %p399
      %p401 = scmp.ne.s32.totalorder %s393, %s396
      %p402 = scmp.eq.s32.totalorder %s27, 0
      %p403 = por %p401, %p402
      %p404 = scmp.ne.s32.totalorder %s393, %s396
      %p405 = scmp.eq.s32.totalorder %s32, 3
      %p406 = por %p404, %p405
      %p407 = scmp.ne.s32.totalorder %s396, %s397
      %p408 = scmp.eq.s32.totalorder %s32, 0
      %p409 = por %p407, %p408
      %p410 = scmp.ne.s32.totalorder %s396, %s397
      %p411 = scmp.eq.s32.totalorder %s33, 3
      %p412 = por %p410, %p411
      %p414 = scmp.ne.s32.totalorder %s397, %s413
      %p415 = scmp.eq.s32.totalorder %s33, 0
      %p416 = por %p414, %p415
      %s417 = ssub.s32 %s35, %s42
      %p418 = scmp.eq.s32.totalorder %s417, 0
      %s420 = sadd.s32 %s419, 1
      %s421 = scalar_select %p418, %s419, %s420
      %p424 = pneg %p418
      %p425 = scmp.eq.s32.totalorder %s27, 3
      %p426 = por %p424, %p425
      %p427 = scmp.ne.s32.totalorder %s419, %s422
      %p428 = scmp.eq.s32.totalorder %s27, 0
      %p429 = por %p427, %p428
      %p430 = scmp.ne.s32.totalorder %s419, %s422
      %p431 = scmp.eq.s32.totalorder %s32, 3
      %p432 = por %p430, %p431
      %p433 = scmp.ne.s32.totalorder %s422, %s423
      %p434 = scmp.eq.s32.totalorder %s32, 0
      %p435 = por %p433, %p434
      %p436 = scmp.ne.s32.totalorder %s422, %s423
      %p437 = scmp.eq.s32.totalorder %s33, 3
      %p438 = por %p436, %p437
      %p440 = scmp.ne.s32.totalorder %s423, %s439
      %p441 = scmp.eq.s32.totalorder %s33, 0
      %p442 = por %p440, %p441
      %s444 = sadd.s32 %s443, 1
      %p447 = scmp.eq.s32.totalorder %s27, 3
      %p448 = scmp.ne.s32.totalorder %s443, %s445
      %p449 = scmp.eq.s32.totalorder %s27, 0
      %p450 = por %p448, %p449
      %p451 = scmp.ne.s32.totalorder %s443, %s445
      %p452 = scmp.eq.s32.totalorder %s32, 3
      %p453 = por %p451, %p452
      %p454 = scmp.ne.s32.totalorder %s445, %s446
      %p455 = scmp.eq.s32.totalorder %s32, 0
      %p456 = por %p454, %p455
      %p457 = scmp.ne.s32.totalorder %s445, %s446
      %p458 = scmp.eq.s32.totalorder %s33, 3
      %p459 = por %p457, %p458
      %p461 = scmp.ne.s32.totalorder %s446, %s460
      %p462 = scmp.eq.s32.totalorder %s33, 0
      %p463 = por %p461, %p462
      %s465 = sadd.s32 %s464, 1
      %p468 = scmp.eq.s32.totalorder %s27, 3
      %p469 = scmp.ne.s32.totalorder %s464, %s466
      %p470 = scmp.eq.s32.totalorder %s27, 0
      %p471 = por %p469, %p470
      %p472 = scmp.ne.s32.totalorder %s464, %s466
      %p473 = scmp.eq.s32.totalorder %s32, 3
      %p474 = por %p472, %p473
      %p475 = scmp.ne.s32.totalorder %s466, %s467
      %p476 = scmp.eq.s32.totalorder %s32, 0
      %p477 = por %p475, %p476
      %p478 = scmp.ne.s32.totalorder %s466, %s467
      %p479 = scmp.eq.s32.totalorder %s33, 3
      %p480 = por %p478, %p479
      %p482 = scmp.ne.s32.totalorder %s467, %s481
      %p483 = scmp.eq.s32.totalorder %s33, 0
      %p484 = por %p482, %p483
      %s485 = ssub.s32 %s34, %s46
      %p486 = scmp.eq.s32.totalorder %s485, 0
      %s488 = sadd.s32 %s487, 1
      %s489 = scalar_select %p486, %s487, %s488
      %p492 = pneg %p486
      %p493 = scmp.eq.s32.totalorder %s27, 3
      %p494 = por %p492, %p493
      %p495 = scmp.ne.s32.totalorder %s487, %s490
      %p496 = scmp.eq.s32.totalorder %s27, 0
      %p497 = por %p495, %p496
      %p498 = scmp.ne.s32.totalorder %s487, %s490
      %p499 = scmp.eq.s32.totalorder %s32, 3
      %p500 = por %p498, %p499
      %p501 = scmp.ne.s32.totalorder %s490, %s491
      %p502 = scmp.eq.s32.totalorder %s32, 0
      %p503 = por %p501, %p502
      %p504 = scmp.ne.s32.totalorder %s490, %s491
      %p505 = scmp.eq.s32.totalorder %s33, 3
      %p506 = por %p504, %p505
      %p508 = scmp.ne.s32.totalorder %s491, %s507
      %p509 = scmp.eq.s32.totalorder %s33, 0
      %p510 = por %p508, %p509
      %p511 = scmp.le.s32.totalorder 1, %s27
      %p512 = scmp.lt.s32.totalorder %s27, 5
      %p513 = pnand %p511, %p512
      %p514 = pneg %p513
      // Predicated region
      $region9: #{tpu_custom_call.1} parent=5 // pred_check
        _
      $region10: #{tpu_custom_call.1} parent=5 // pred_check_branch
        %516 = sbr.rel (%p513) target = $region12
      $region11: #{tpu_custom_call.1} parent=5 // pred_region
        %s517 = ssub.s32 %s27, 1
        // Predicated region
        $region13: #{tpu_custom_call.1} parent=11 // pred_check
          %p518 = pneg %p86
        $region14: #{tpu_custom_call.1} parent=11 // pred_check_branch
          %520 = sbr.rel (%p518) target = $region16
        $region15: #{tpu_custom_call.1} parent=11 // pred_region
          _
        $region16: #{tpu_custom_call.1} parent=11 // pred_fallthru
          _
        // Predicated region
        $region17: #{tpu_custom_call.1} parent=11 // pred_check
          %p521 = pneg %p107
        $region18: #{tpu_custom_call.1} parent=11 // pred_check_branch
          %523 = sbr.rel (%p521) target = $region20
        $region19: #{tpu_custom_call.1} parent=11 // pred_region
          _
        $region20: #{tpu_custom_call.1} parent=11 // pred_fallthru
          _
        // Predicated region
        $region21: #{tpu_custom_call.1} parent=11 // pred_check
          %p524 = pneg %p128
        $region22: #{tpu_custom_call.1} parent=11 // pred_check_branch
          %526 = sbr.rel (%p524) target = $region24
        $region23: #{tpu_custom_call.1} parent=11 // pred_region
          _
        $region24: #{tpu_custom_call.1} parent=11 // pred_fallthru
          _
        // Predicated region
        $region25: #{tpu_custom_call.1} parent=11 // pred_check
          %p527 = pneg %p149
        $region26: #{tpu_custom_call.1} parent=11 // pred_check_branch
          %529 = sbr.rel (%p527) target = $region28
        $region27: #{tpu_custom_call.1} parent=11 // pred_region
          _
        $region28: #{tpu_custom_call.1} parent=11 // pred_fallthru
          _
        // Predicated region
        $region29: #{tpu_custom_call.1} parent=11 // pred_check
          %p530 = pneg %p456
        $region30: #{tpu_custom_call.1} parent=11 // pred_check_branch
          %532 = sbr.rel (%p530) target = $region32
        $region31: #{tpu_custom_call.1} parent=11 // pred_region
          _
        $region32: #{tpu_custom_call.1} parent=11 // pred_fallthru
          _
        // Predicated region
        $region33: #{tpu_custom_call.1} parent=11 // pred_check
          %p533 = pneg %p477
        $region34: #{tpu_custom_call.1} parent=11 // pred_check_branch
          %535 = sbr.rel (%p533) target = $region36
        $region35: #{tpu_custom_call.1} parent=11 // pred_region
          _
        $region36: #{tpu_custom_call.1} parent=11 // pred_fallthru
          _
      $region12: #{tpu_custom_call.1} parent=5 // pred_fallthru
        _
      %p536 = scmp.lt.s32.totalorder %s27, 4
      // Predicated region
      $region37: #{tpu_custom_call.1} parent=5 // pred_check
        %p537 = pneg %p536
      $region38: #{tpu_custom_call.1} parent=5 // pred_check_branch
        %539 = sbr.rel (%p537) target = $region40
      $region39: #{tpu_custom_call.1} parent=5 // pred_region
        // Predicated region
        $region41: #{tpu_custom_call.1} parent=39 // pred_check
          %p540 = pneg %p59
        $region42: #{tpu_custom_call.1} parent=39 // pred_check_branch
          %542 = sbr.rel (%p540) target = $region44
        $region43: #{tpu_custom_call.1} parent=39 // pred_region
          %p543 = scmp.lt.s32.totalorder %s34, 1
          %s544 = scalar_select %p543, %s34, 1
          %s545 = smul.addr %s544, 8
          %s546 = scalar_lea.vmem %s0, %s545
        $region44: #{tpu_custom_call.1} parent=39 // pred_fallthru
          _
        // Predicated region
        $region45: #{tpu_custom_call.1} parent=39 // pred_check
          %p547 = pneg %p169
        $region46: #{tpu_custom_call.1} parent=39 // pred_check_branch
          %549 = sbr.rel (%p547) target = $region48
        $region47: #{tpu_custom_call.1} parent=39 // pred_region
          %p550 = scmp.lt.s32.totalorder %s35, 1
          %s551 = scalar_select %p550, %s35, 1
          %s552 = scalar_lea.vmem %s5, %s551
        $region48: #{tpu_custom_call.1} parent=39 // pred_fallthru
          _
        // Predicated region
        $region49: #{tpu_custom_call.1} parent=39 // pred_check
          %p553 = pneg %p195
        $region50: #{tpu_custom_call.1} parent=39 // pred_check_branch
          %555 = sbr.rel (%p553) target = $region52
        $region51: #{tpu_custom_call.1} parent=39 // pred_region
          %p556 = scmp.lt.s32.totalorder %s35, 1
          %s557 = scalar_select %p556, %s35, 1
          %s558 = scalar_lea.vmem %s6, %s557
        $region52: #{tpu_custom_call.1} parent=39 // pred_fallthru
          _
        // Predicated region
        $region53: #{tpu_custom_call.1} parent=39 // pred_check
          %p559 = pneg %p221
        $region54: #{tpu_custom_call.1} parent=39 // pred_check_branch
          %561 = sbr.rel (%p559) target = $region56
        $region55: #{tpu_custom_call.1} parent=39 // pred_region
          %p562 = scmp.lt.s32.totalorder %s35, 1
          %s563 = scalar_select %p562, %s35, 1
          %s564 = smul.addr %s563, 12
          %s565 = smul.addr %s564, 4
          %s566 = scalar_lea.vmem %s7, %s565
        $region56: #{tpu_custom_call.1} parent=39 // pred_fallthru
          _
        // Predicated region
        $region57: #{tpu_custom_call.1} parent=39 // pred_check
          %p567 = pneg %p247
        $region58: #{tpu_custom_call.1} parent=39 // pred_check_branch
          %569 = sbr.rel (%p567) target = $region60
        $region59: #{tpu_custom_call.1} parent=39 // pred_region
          %p570 = scmp.lt.s32.totalorder %s35, 1
          %s571 = scalar_select %p570, %s35, 1
          %s572 = smul.addr %s571, 4
          %s573 = smul.addr %s572, 4
          %s574 = scalar_lea.vmem %s8, %s573
        $region60: #{tpu_custom_call.1} parent=39 // pred_fallthru
          _
        // Predicated region
        $region61: #{tpu_custom_call.1} parent=39 // pred_check
          %p575 = pneg %p273
        $region62: #{tpu_custom_call.1} parent=39 // pred_check_branch
          %577 = sbr.rel (%p575) target = $region64
        $region63: #{tpu_custom_call.1} parent=39 // pred_region
          %p578 = scmp.lt.s32.totalorder %s35, 1
          %s579 = scalar_select %p578, %s35, 1
          %s580 = scalar_lea.vmem %s9, %s579
        $region64: #{tpu_custom_call.1} parent=39 // pred_fallthru
          _
        // Predicated region
        $region65: #{tpu_custom_call.1} parent=39 // pred_check
          %p581 = pneg %p299
        $region66: #{tpu_custom_call.1} parent=39 // pred_check_branch
          %583 = sbr.rel (%p581) target = $region68
        $region67: #{tpu_custom_call.1} parent=39 // pred_region
          %p584 = scmp.lt.s32.totalorder %s35, 1
          %s585 = scalar_select %p584, %s35, 1
          %s586 = scalar_lea.vmem %s10, %s585
        $region68: #{tpu_custom_call.1} parent=39 // pred_fallthru
          _
        // Predicated region
        $region69: #{tpu_custom_call.1} parent=39 // pred_check
          %p587 = pneg %p325
        $region70: #{tpu_custom_call.1} parent=39 // pred_check_branch
          %589 = sbr.rel (%p587) target = $region72
        $region71: #{tpu_custom_call.1} parent=39 // pred_region
          %p590 = scmp.lt.s32.totalorder %s35, 1
          %s591 = scalar_select %p590, %s35, 1
          %s592 = scalar_lea.vmem %s11, %s591
        $region72: #{tpu_custom_call.1} parent=39 // pred_fallthru
          _
        // Predicated region
        $region73: #{tpu_custom_call.1} parent=39 // pred_check
          %p593 = pneg %p351
        $region74: #{tpu_custom_call.1} parent=39 // pred_check_branch
          %595 = sbr.rel (%p593) target = $region76
        $region75: #{tpu_custom_call.1} parent=39 // pred_region
          %p596 = scmp.lt.s32.totalorder %s35, 1
          %s597 = scalar_select %p596, %s35, 1
          %s598 = smul.addr %s597, 8
          %s599 = smul.addr %s598, 4
          %s600 = scalar_lea.vmem %s12, %s599
        $region76: #{tpu_custom_call.1} parent=39 // pred_fallthru
          _
        // Predicated region
        $region77: #{tpu_custom_call.1} parent=39 // pred_check
          %p601 = pneg %p377
        $region78: #{tpu_custom_call.1} parent=39 // pred_check_branch
          %603 = sbr.rel (%p601) target = $region80
        $region79: #{tpu_custom_call.1} parent=39 // pred_region
          %p604 = scmp.lt.s32.totalorder %s35, 1
          %s605 = scalar_select %p604, %s35, 1
          %s606 = scalar_lea.vmem %s13, %s605
        $region80: #{tpu_custom_call.1} parent=39 // pred_fallthru
          _
        // Predicated region
        $region81: #{tpu_custom_call.1} parent=39 // pred_check
          %p607 = pneg %p403
        $region82: #{tpu_custom_call.1} parent=39 // pred_check_branch
          %609 = sbr.rel (%p607) target = $region84
        $region83: #{tpu_custom_call.1} parent=39 // pred_region
          %p610 = scmp.lt.s32.totalorder %s35, 1
          %s611 = scalar_select %p610, %s35, 1
          %s612 = smul.addr %s611, 4
          %s613 = smul.addr %s612, 4
          %s614 = scalar_lea.vmem %s14, %s613
        $region84: #{tpu_custom_call.1} parent=39 // pred_fallthru
          _
        // Predicated region
        $region85: #{tpu_custom_call.1} parent=39 // pred_check
          %p615 = pneg %p429
        $region86: #{tpu_custom_call.1} parent=39 // pred_check_branch
          %617 = sbr.rel (%p615) target = $region88
        $region87: #{tpu_custom_call.1} parent=39 // pred_region
          %p618 = scmp.lt.s32.totalorder %s35, 1
          %s619 = scalar_select %p618, %s35, 1
          %s620 = scalar_lea.vmem %s15, %s619
        $region88: #{tpu_custom_call.1} parent=39 // pred_fallthru
          _
      $region40: #{tpu_custom_call.1} parent=5 // pred_fallthru
        _
      %p621 = scmp.le.s32.totalorder 1, %s27
      %p622 = scmp.lt.s32.totalorder %s27, 5
      %p623 = pnand %p621, %p622
      %p624 = pneg %p623
      // Predicated region
      $region89: #{tpu_custom_call.1} parent=5 // pred_check
        _
      $region90: #{tpu_custom_call.1} parent=5 // pred_check_branch
        %626 = sbr.rel (%p623) target = $region92
      $region91: #{tpu_custom_call.1} parent=5 // pred_region
        %s627 = ssub.s32 %s27, 1
        %p628 = scmp.lt.s32.totalorder %s36, 1
        %s629 = scalar_select %p628, %s36, 1
        %s630 = smul.addr %s629, 8
        %s631 = scalar_lea.vmem %s0, %s630
        %p632 = pneg %p65
        %p633 = pneg %p62
        %p634 = pneg %p86
        %p635 = pneg %p83
        %p636 = pneg %p107
        %p637 = pneg %p104
        %p638 = pneg %p128
        %p639 = pneg %p125
        %p640 = pneg %p149
        %p641 = pneg %p146
        %p642 = scmp.lt.s32.totalorder %s37, 1
        %s643 = scalar_select %p642, %s37, 1
        %s644 = scalar_lea.vmem %s5, %s643
        %p645 = pneg %p175
        %p646 = pneg %p172
        %p647 = scmp.lt.s32.totalorder %s37, 1
        %s648 = scalar_select %p647, %s37, 1
        %s649 = scalar_lea.vmem %s6, %s648
        %p650 = pneg %p201
        %p651 = pneg %p198
        %p652 = scmp.lt.s32.totalorder %s37, 1
        %s653 = scalar_select %p652, %s37, 1
        %s654 = smul.addr %s653, 12
        %s655 = smul.addr %s654, 4
        %s656 = scalar_lea.vmem %s7, %s655
        %p657 = pneg %p227
        %p658 = pneg %p224
        %p659 = scmp.lt.s32.totalorder %s37, 1
        %s660 = scalar_select %p659, %s37, 1
        %s661 = smul.addr %s660, 4
        %s662 = smul.addr %s661, 4
        %s663 = scalar_lea.vmem %s8, %s662
        %p664 = pneg %p253
        %p665 = pneg %p250
        %p666 = scmp.lt.s32.totalorder %s37, 1
        %s667 = scalar_select %p666, %s37, 1
        %s668 = scalar_lea.vmem %s9, %s667
        %p669 = pneg %p279
        %p670 = pneg %p276
        %p671 = scmp.lt.s32.totalorder %s37, 1
        %s672 = scalar_select %p671, %s37, 1
        %s673 = scalar_lea.vmem %s10, %s672
        %p674 = pneg %p305
        %p675 = pneg %p302
        %p676 = scmp.lt.s32.totalorder %s37, 1
        %s677 = scalar_select %p676, %s37, 1
        %s678 = scalar_lea.vmem %s11, %s677
        %p679 = pneg %p331
        %p680 = pneg %p328
        %p681 = scmp.lt.s32.totalorder %s37, 1
        %s682 = scalar_select %p681, %s37, 1
        %s683 = smul.addr %s682, 8
        %s684 = smul.addr %s683, 4
        %s685 = scalar_lea.vmem %s12, %s684
        %p686 = pneg %p357
        %p687 = pneg %p354
        %p688 = scmp.lt.s32.totalorder %s37, 1
        %s689 = scalar_select %p688, %s37, 1
        %s690 = scalar_lea.vmem %s13, %s689
        %p691 = pneg %p383
        %p692 = pneg %p380
        %p693 = scmp.lt.s32.totalorder %s37, 1
        %s694 = scalar_select %p693, %s37, 1
        %s695 = smul.addr %s694, 4
        %s696 = smul.addr %s695, 4
        %s697 = scalar_lea.vmem %s14, %s696
        %p698 = pneg %p409
        %p699 = pneg %p406
        %p700 = scmp.lt.s32.totalorder %s37, 1
        %s701 = scalar_select %p700, %s37, 1
        %s702 = scalar_lea.vmem %s15, %s701
        %p703 = pneg %p435
        %p704 = pneg %p432
        %p705 = pneg %p456
        %p706 = pneg %p453
        %p707 = pneg %p477
        %p708 = pneg %p474
        %p709 = pneg %p503
        %p710 = pneg %p500
        %s711 = sand.u32 %s490, 1
        %s712 = scalar_lea.sflag [#allocation4], %s711
        %s713 = sand.u32 %s490, 1
        %s714 = smul.addr %s713, 8
        %s715 = scalar_lea.vmem [#allocation3], %s714
        %p716 = scmp.lt.s32.totalorder %s36, 1
        %s717 = scalar_select %p716, %s36, 1
        %s718 = smul.addr %s717, 8
        %s719 = scalar_lea.vmem %s0, %s718
        %p720 = scmp.lt.s32.totalorder %s37, 1
        %s721 = scalar_select %p720, %s37, 1
        %s722 = scalar_lea.vmem %s5, %s721
        %p723 = scmp.lt.s32.totalorder %s37, 1
        %s724 = scalar_select %p723, %s37, 1
        %s725 = scalar_lea.vmem %s6, %s724
        %p726 = scmp.lt.s32.totalorder %s37, 1
        %s727 = scalar_select %p726, %s37, 1
        %s728 = smul.addr %s727, 12
        %s729 = smul.addr %s728, 4
        %s730 = scalar_lea.vmem %s7, %s729
        %p731 = scmp.lt.s32.totalorder %s37, 1
        %s732 = scalar_select %p731, %s37, 1
        %s733 = smul.addr %s732, 4
        %s734 = smul.addr %s733, 4
        %s735 = scalar_lea.vmem %s8, %s734
        %p736 = scmp.lt.s32.totalorder %s37, 1
        %s737 = scalar_select %p736, %s37, 1
        %s738 = scalar_lea.vmem %s9, %s737
        %p739 = scmp.lt.s32.totalorder %s37, 1
        %s740 = scalar_select %p739, %s37, 1
        %s741 = scalar_lea.vmem %s10, %s740
        %p742 = scmp.lt.s32.totalorder %s37, 1
        %s743 = scalar_select %p742, %s37, 1
        %s744 = scalar_lea.vmem %s11, %s743
        %p745 = scmp.lt.s32.totalorder %s37, 1
        %s746 = scalar_select %p745, %s37, 1
        %s747 = smul.addr %s746, 8
        %s748 = smul.addr %s747, 4
        %s749 = scalar_lea.vmem %s12, %s748
        %p750 = scmp.lt.s32.totalorder %s37, 1
        %s751 = scalar_select %p750, %s37, 1
        %s752 = scalar_lea.vmem %s13, %s751
        %p753 = scmp.lt.s32.totalorder %s37, 1
        %s754 = scalar_select %p753, %s37, 1
        %s755 = smul.addr %s754, 4
        %s756 = smul.addr %s755, 4
        %s757 = scalar_lea.vmem %s14, %s756
        %p758 = scmp.lt.s32.totalorder %s37, 1
        %s759 = scalar_select %p758, %s37, 1
        %s760 = scalar_lea.vmem %s15, %s759
        %p762 = scmp.eq.s32.totalorder %s37, 0
        // Predicated region
        $region93: #{tpu_custom_call.1} parent=91 // pred_check
          %p763 = pneg %p762
        $region94: #{tpu_custom_call.1} parent=91 // pred_check_branch
          %765 = sbr.rel (%p763) target = $region96
        $region95: #{tpu_custom_call.1} parent=91 // pred_region
          %v766 = vld [vmem:[%s719] sm:$0xff]
          %v767 = vld [vmem:[%s1] sm:$0xf]
          %v768 = vld [vmem:[%s1 + $0x4] sm:$0xf]
          %v769 = vld [vmem:[%s1 + $0x8] sm:$0xf]
          %v770 = vld [vmem:[%s1 + $0xc] sm:$0xf]
          %v771 = vpack.c.bf16 %v766, %v766
          %v772 = vld [vmem:[%s2] sm:$0x1]
          %v774 = vlaneseq
          %v775 = vshrl.u32 %v774, 7
          %v776 = vsub.s32 0, %v775
          %v777 = vrot.slane %v772, %v776
          %v783 = vunpack.c.l.b16 %v767
          %v784 = vunpack.c.l.b16 %v768
          %v785 = vunpack.c.l.b16 %v769
          %v786 = vunpack.c.l.b16 %v770
          %v787 = vpack.c.b16 %v784, %v783
          %v788 = vpack.c.b16 %v786, %v785
          %vm789 = vcmask 97280
          %v791 = vsel %vm789, %v771, 0
          %v794 = vsel %vm789, %v787, 0
          %v797 = vsel %vm789, %v788, 0
          %799 = vmatprep.subr.bf16.mxu0 0
          %800 = vmatpush1.bf16.xpose.msra.mxu0 %v794
          %801 = vmatprep.subr.bf16.mxu0 0
          %802 = vmatpush1.bf16.xpose.msra.mxu0 %v797
          %803 = vmatprep.subr.bf16.mxu0 0
          %804 = vmatpush1.bf16.xpose.msra.mxu0 0
          %805 = vmatprep.subr.bf16.mxu0 0
          %806 = vmatpush1.bf16.xpose.msra.mxu0 0
          %807 = vmatprep.subr.bf16.mxu0 0
          %808 = vmatpush1.bf16.xpose.msra.mxu0 0
          %809 = vmatprep.subr.bf16.mxu0 0
          %810 = vmatpush1.bf16.xpose.msra.mxu0 0
          %811 = vmatprep.subr.bf16.mxu0 0
          %812 = vmatpush1.bf16.xpose.msra.mxu0 0
          %813 = vmatprep.subr.bf16.mxu0 0
          %814 = vmatpush1.bf16.xpose.msra.mxu0 0
          %815 = vmatprep.subr.bf16.mxu0 0
          %816 = vmatpush1.bf16.xpose.msra.mxu0 0
          %817 = vmatprep.subr.bf16.mxu0 0
          %818 = vmatpush1.bf16.xpose.msra.mxu0 0
          %819 = vmatprep.subr.bf16.mxu0 0
          %820 = vmatpush1.bf16.xpose.msra.mxu0 0
          %821 = vmatprep.subr.bf16.mxu0 0
          %822 = vmatpush1.bf16.xpose.msra.mxu0 0
          %823 = vmatprep.subr.bf16.mxu0 0
          %824 = vmatpush1.bf16.xpose.msra.mxu0 0
          %825 = vmatprep.subr.bf16.mxu0 0
          %826 = vmatpush1.bf16.xpose.msra.mxu0 0
          %827 = vmatprep.subr.bf16.mxu0 0
          %828 = vmatpush1.bf16.xpose.msra.mxu0 0
          %829 = vmatprep.subr.bf16.mxu0 0
          %830 = vmatpush1.bf16.xpose.msra.mxu0 0
          %831 = vmatprep.mubr.bf16.mxu0 0
          %832 = vmatmul.mubr.bf16.gmra.mrb[0].mxu0 %v791
          %v833 = vpop.f32.mrb[0].mxu0
          %v834 = vadd.f32 %v777, %v833
          %v835 = vpop.f32.mrb[0].mxu0
          %v836 = vpop.f32.mrb[0].mxu0
          %v837 = vpop.f32.mrb[0].mxu0
          %838 = vdwg.mxu0
          %v839 = vld [vmem:[%s3] sm:$0xff]
          %v840 = vadd.f32 %v834, %v839
          %vm841 = vcmask 261120
          %842 = vst.msk [vmem:[#allocation2] sm:$0xff] %vm841, %v840
        $region96: #{tpu_custom_call.1} parent=91 // pred_fallthru
          _
        %v843 = vld [vmem:[#allocation2] sm:$0xff]
        %v844 = vld [vmem:[%s722] sm:$0x1]
        %v845 = vld [vmem:[%s725] sm:$0x1]
        %vm846 = vcmask 261120
        %v847 = vsel %vm846, %v843, 0.0
        %848 = vadd.xlane.f32.xlu0 %v847
        %v849 = vpop.xlane.xlu0 %848
        %v850 = vrcp.pop 32.0
        %v851 = vmul.f32 %v849, %v850
        %v852 = vsub.f32 %v843, %v851
        %v853 = vmul.f32 %v852, %v852
        %v854 = vsel %vm846, %v853, 0.0
        %855 = vadd.xlane.f32.xlu0 %v854
        %v856 = vpop.xlane.xlu0 %855
        %v857 = vmul.f32 %v856, %v850
        %v858 = vadd.f32 %v857, 1e-05
        %v859 = vrsqrt.pop %v858
        %v860 = vmul.f32 %v852, %v859
        %v862 = vlaneseq
        %v863 = vshrl.u32 %v862, 7
        %v864 = vsub.s32 0, %v863
        %v865 = vrot.slane %v844, %v864
        %v867 = vmul.f32 %v860, %v865
        %v869 = vlaneseq
        %v870 = vshrl.u32 %v869, 7
        %v871 = vsub.s32 0, %v870
        %v872 = vrot.slane %v845, %v871
        %v874 = vadd.f32 %v867, %v872
        %v875 = vld [vmem:[%s730] sm:$0xf]
        %v876 = vld [vmem:[%s730 + $0x4] sm:$0xf]
        %v877 = vld [vmem:[%s730 + $0x8] sm:$0xf]
        %v878 = vld [vmem:[%s730 + $0xc] sm:$0xf]
        %v879 = vld [vmem:[%s730 + $0x10] sm:$0xf]
        %v880 = vld [vmem:[%s730 + $0x14] sm:$0xf]
        %v881 = vld [vmem:[%s730 + $0x18] sm:$0xf]
        %v882 = vld [vmem:[%s730 + $0x1c] sm:$0xf]
        %v883 = vld [vmem:[%s730 + $0x20] sm:$0xf]
        %v884 = vld [vmem:[%s730 + $0x24] sm:$0xf]
        %v885 = vld [vmem:[%s730 + $0x28] sm:$0xf]
        %v886 = vld [vmem:[%s730 + $0x2c] sm:$0xf]
        %v887 = vpack.c.bf16 %v874, %v874
        %v900 = vunpack.c.l.b16 %v875
        %v901 = vunpack.c.l.b16 %v876
        %v902 = vunpack.c.l.b16 %v877
        %v903 = vunpack.c.l.b16 %v878
        %v904 = vunpack.c.l.b16 %v879
        %v905 = vunpack.c.l.b16 %v880
        %v906 = vunpack.c.l.b16 %v881
        %v907 = vunpack.c.l.b16 %v882
        %v908 = vunpack.c.l.b16 %v883
        %v909 = vunpack.c.l.b16 %v884
        %v910 = vunpack.c.l.b16 %v885
        %v911 = vunpack.c.l.b16 %v886
        %v912 = vpack.c.b16 %v901, %v900
        %v913 = vpack.c.b16 %v903, %v902
        %v914 = vpack.c.b16 %v905, %v904
        %v915 = vpack.c.b16 %v907, %v906
        %v916 = vpack.c.b16 %v909, %v908
        %v917 = vpack.c.b16 %v911, %v910
        %v919 = vsel %vm846, %v887, 0
        %v922 = vsel %vm846, %v912, 0
        %v925 = vsel %vm846, %v913, 0
        %v928 = vsel %vm846, %v914, 0
        %v931 = vsel %vm846, %v915, 0
        %v934 = vsel %vm846, %v916, 0
        %v937 = vsel %vm846, %v917, 0
        %939 = vmatprep.subr.bf16.mxu0 0
        %940 = vmatpush1.bf16.xpose.msra.mxu0 %v922
        %941 = vmatprep.subr.bf16.mxu0 0
        %942 = vmatpush1.bf16.xpose.msra.mxu0 %v925
        %943 = vmatprep.subr.bf16.mxu0 0
        %944 = vmatpush1.bf16.xpose.msra.mxu0 %v928
        %945 = vmatprep.subr.bf16.mxu0 0
        %946 = vmatpush1.bf16.xpose.msra.mxu0 %v931
        %947 = vmatprep.subr.bf16.mxu0 0
        %948 = vmatpush1.bf16.xpose.msra.mxu0 %v934
        %949 = vmatprep.subr.bf16.mxu0 0
        %950 = vmatpush1.bf16.xpose.msra.mxu0 %v937
        %951 = vmatprep.subr.bf16.mxu0 0
        %952 = vmatpush1.bf16.xpose.msra.mxu0 0
        %953 = vmatprep.subr.bf16.mxu0 0
        %954 = vmatpush1.bf16.xpose.msra.mxu0 0
        %955 = vmatprep.subr.bf16.mxu0 0
        %956 = vmatpush1.bf16.xpose.msra.mxu0 0
        %957 = vmatprep.subr.bf16.mxu0 0
        %958 = vmatpush1.bf16.xpose.msra.mxu0 0
        %959 = vmatprep.subr.bf16.mxu0 0
        %960 = vmatpush1.bf16.xpose.msra.mxu0 0
        %961 = vmatprep.subr.bf16.mxu0 0
        %962 = vmatpush1.bf16.xpose.msra.mxu0 0
        %963 = vmatprep.subr.bf16.mxu0 0
        %964 = vmatpush1.bf16.xpose.msra.mxu0 0
        %965 = vmatprep.subr.bf16.mxu0 0
        %966 = vmatpush1.bf16.xpose.msra.mxu0 0
        %967 = vmatprep.subr.bf16.mxu0 0
        %968 = vmatpush1.bf16.xpose.msra.mxu0 0
        %969 = vmatprep.subr.bf16.mxu0 0
        %970 = vmatpush1.bf16.xpose.msra.mxu0 0
        %971 = vmatprep.mubr.bf16.mxu0 0
        %972 = vmatmul.mubr.bf16.gmra.mrb[0].mxu0 %v919
        %v973 = vpop.f32.mrb[0].mxu0
        %v974 = vadd.f32 0.0, %v973
        %v975 = vpop.f32.mrb[0].mxu0
        %v976 = vpop.f32.mrb[0].mxu0
        %v977 = vpop.f32.mrb[0].mxu0
        %978 = vdwg.mxu0
        %980 = vrot.lane.b32.xlu0 %v974, 120
        %v981 = vpop.permute.xlu0 %980
        %983 = vrot.lane.b32.xlu0 %v974, 112
        %v984 = vpop.permute.xlu0 %983
        %986 = vrot.lane.b32.xlu0 %v974, 104
        %v987 = vpop.permute.xlu0 %986
        %v989 = vpack.c.bf16 %v974, %v974
        %v990 = vpack.c.bf16 %v981, %v981
        %v991 = vpack.c.bf16 %v984, %v984
        %v992 = vpack.c.bf16 %v987, %v987
        %994 = vrot.lane.b32.xlu0 %v989, 96
        %v995 = vpop.permute.xlu0 %994
        %vm996 = vcmask 64512
        %v998 = vsel %vm996, %v989, 0
        %v1001 = vsel %vm996, %v995, 0
        %1003 = vmatprep.subr.bf16.mxu0 0
        %1004 = vmatpush1.bf16.xpose.msra.mxu0 %v1001
        %1005 = vmatprep.subr.bf16.mxu0 0
        %1006 = vmatpush1.bf16.xpose.msra.mxu0 0
        %1007 = vmatprep.subr.bf16.mxu0 0
        %1008 = vmatpush1.bf16.xpose.msra.mxu0 0
        %1009 = vmatprep.subr.bf16.mxu0 0
        %1010 = vmatpush1.bf16.xpose.msra.mxu0 0
        %1011 = vmatprep.subr.bf16.mxu0 0
        %1012 = vmatpush1.bf16.xpose.msra.mxu0 0
        %1013 = vmatprep.subr.bf16.mxu0 0
        %1014 = vmatpush1.bf16.xpose.msra.mxu0 0
        %1015 = vmatprep.subr.bf16.mxu0 0
        %1016 = vmatpush1.bf16.xpose.msra.mxu0 0
        %1017 = vmatprep.subr.bf16.mxu0 0
        %1018 = vmatpush1.bf16.xpose.msra.mxu0 0
        %1019 = vmatprep.subr.bf16.mxu0 0
        %1020 = vmatpush1.bf16.xpose.msra.mxu0 0
        %1021 = vmatprep.subr.bf16.mxu0 0
        %1022 = vmatpush1.bf16.xpose.msra.mxu0 0
        %1023 = vmatprep.subr.bf16.mxu0 0
        %1024 = vmatpush1.bf16.xpose.msra.mxu0 0
        %1025 = vmatprep.subr.bf16.mxu0 0
        %1026 = vmatpush1.bf16.xpose.msra.mxu0 0
        %1027 = vmatprep.subr.bf16.mxu0 0
        %1028 = vmatpush1.bf16.xpose.msra.mxu0 0
        %1029 = vmatprep.subr.bf16.mxu0 0
        %1030 = vmatpush1.bf16.xpose.msra.mxu0 0
        %1031 = vmatprep.subr.bf16.mxu0 0
        %1032 = vmatpush1.bf16.xpose.msra.mxu0 0
        %1033 = vmatprep.subr.bf16.mxu0 0
        %1034 = vmatpush1.bf16.xpose.msra.mxu0 0
        %1035 = vmatprep.mubr.bf16.mxu0 0
        %1036 = vmatmul.mubr.bf16.gmra.mrb[0].mxu0 %v998
        %v1037 = vpop.f32.mrb[0].mxu0
        %v1038 = vadd.f32 0.0, %v1037
        %v1039 = vpop.f32.mrb[0].mxu0
        %v1040 = vpop.f32.mrb[0].mxu0
        %v1041 = vpop.f32.mrb[0].mxu0
        %1042 = vdwg.mxu0
        %1044 = vrot.lane.b32.xlu0 %v990, 96
        %v1045 = vpop.permute.xlu0 %1044
        %v1047 = vsel %vm996, %v990, 0
        %v1050 = vsel %vm996, %v1045, 0
        %1052 = vmatprep.subr.bf16.mxu0 0
        %1053 = vmatpush1.bf16.xpose.msra.mxu0 %v1050
        %1054 = vmatprep.subr.bf16.mxu0 0
        %1055 = vmatpush1.bf16.xpose.msra.mxu0 0
        %1056 = vmatprep.subr.bf16.mxu0 0
        %1057 = vmatpush1.bf16.xpose.msra.mxu0 0
        %1058 = vmatprep.subr.bf16.mxu0 0
        %1059 = vmatpush1.bf16.xpose.msra.mxu0 0
        %1060 = vmatprep.subr.bf16.mxu0 0
        %1061 = vmatpush1.bf16.xpose.msra.mxu0 0
        %1062 = vmatprep.subr.bf16.mxu0 0
        %1063 = vmatpush1.bf16.xpose.msra.mxu0 0
        %1064 = vmatprep.subr.bf16.mxu0 0
        %1065 = vmatpush1.bf16.xpose.msra.mxu0 0
        %1066 = vmatprep.subr.bf16.mxu0 0
        %1067 = vmatpush1.bf16.xpose.msra.mxu0 0
        %1068 = vmatprep.subr.bf16.mxu0 0
        %1069 = vmatpush1.bf16.xpose.msra.mxu0 0
        %1070 = vmatprep.subr.bf16.mxu0 0
        %1071 = vmatpush1.bf16.xpose.msra.mxu0 0
        %1072 = vmatprep.subr.bf16.mxu0 0
        %1073 = vmatpush1.bf16.xpose.msra.mxu0 0
        %1074 = vmatprep.subr.bf16.mxu0 0
        %1075 = vmatpush1.bf16.xpose.msra.mxu0 0
        %1076 = vmatprep.subr.bf16.mxu0 0
        %1077 = vmatpush1.bf16.xpose.msra.mxu0 0
        %1078 = vmatprep.subr.bf16.mxu0 0
        %1079 = vmatpush1.bf16.xpose.msra.mxu0 0
        %1080 = vmatprep.subr.bf16.mxu0 0
        %1081 = vmatpush1.bf16.xpose.msra.mxu0 0
        %1082 = vmatprep.subr.bf16.mxu0 0
        %1083 = vmatpush1.bf16.xpose.msra.mxu0 0
        %1084 = vmatprep.mubr.bf16.mxu0 0
        %1085 = vmatmul.mubr.bf16.gmra.mrb[0].mxu0 %v1047
        %v1086 = vpop.f32.mrb[0].mxu0
        %v1087 = vadd.f32 0.0, %v1086
        %v1088 = vpop.f32.mrb[0].mxu0
        %v1089 = vpop.f32.mrb[0].mxu0
        %v1090 = vpop.f32.mrb[0].mxu0
        %1091 = vdwg.mxu0
        %1093 = vrot.lane.b32.xlu0 %v991, 96
        %v1094 = vpop.permute.xlu0 %1093
        %v1096 = vsel %vm996, %v991, 0
        %v1099 = vsel %vm996, %v1094, 0
        %1101 = vmatprep.subr.bf16.mxu0 0
        %1102 = vmatpush1.bf16.xpose.msra.mxu0 %v1099
        %1103 = vmatprep.subr.bf16.mxu0 0
        %1104 = vmatpush1.bf16.xpose.msra.mxu0 0
        %1105 = vmatprep.subr.bf16.mxu0 0
        %1106 = vmatpush1.bf16.xpose.msra.mxu0 0
        %1107 = vmatprep.subr.bf16.mxu0 0
        %1108 = vmatpush1.bf16.xpose.msra.mxu0 0
        %1109 = vmatprep.subr.bf16.mxu0 0
        %1110 = vmatpush1.bf16.xpose.msra.mxu0 0
        %1111 = vmatprep.subr.bf16.mxu0 0
        %1112 = vmatpush1.bf16.xpose.msra.mxu0 0
        %1113 = vmatprep.subr.bf16.mxu0 0
        %1114 = vmatpush1.bf16.xpose.msra.mxu0 0
        %1115 = vmatprep.subr.bf16.mxu0 0
        %1116 = vmatpush1.bf16.xpose.msra.mxu0 0
        %1117 = vmatprep.subr.bf16.mxu0 0
        %1118 = vmatpush1.bf16.xpose.msra.mxu0 0
        %1119 = vmatprep.subr.bf16.mxu0 0
        %1120 = vmatpush1.bf16.xpose.msra.mxu0 0
        %1121 = vmatprep.subr.bf16.mxu0 0
        %1122 = vmatpush1.bf16.xpose.msra.mxu0 0
        %1123 = vmatprep.subr.bf16.mxu0 0
        %1124 = vmatpush1.bf16.xpose.msra.mxu0 0
        %1125 = vmatprep.subr.bf16.mxu0 0
        %1126 = vmatpush1.bf16.xpose.msra.mxu0 0
        %1127 = vmatprep.subr.bf16.mxu0 0
        %1128 = vmatpush1.bf16.xpose.msra.mxu0 0
        %1129 = vmatprep.subr.bf16.mxu0 0
        %1130 = vmatpush1.bf16.xpose.msra.mxu0 0
        %1131 = vmatprep.subr.bf16.mxu0 0
        %1132 = vmatpush1.bf16.xpose.msra.mxu0 0
        %1133 = vmatprep.mubr.bf16.mxu0 0
        %1134 = vmatmul.mubr.bf16.gmra.mrb[0].mxu0 %v1096
        %v1135 = vpop.f32.mrb[0].mxu0
        %v1136 = vadd.f32 0.0, %v1135
        %v1137 = vpop.f32.mrb[0].mxu0
        %v1138 = vpop.f32.mrb[0].mxu0
        %v1139 = vpop.f32.mrb[0].mxu0
        %1140 = vdwg.mxu0
        %1142 = vrot.lane.b32.xlu0 %v992, 96
        %v1143 = vpop.permute.xlu0 %1142
        %v1145 = vsel %vm996, %v992, 0
        %v1148 = vsel %vm996, %v1143, 0
        %1150 = vmatprep.subr.bf16.mxu0 0
        %1151 = vmatpush1.bf16.xpose.msra.mxu0 %v1148
        %1152 = vmatprep.subr.bf16.mxu0 0
        %1153 = vmatpush1.bf16.xpose.msra.mxu0 0
        %1154 = vmatprep.subr.bf16.mxu0 0
        %1155 = vmatpush1.bf16.xpose.msra.mxu0 0
        %1156 = vmatprep.subr.bf16.mxu0 0
        %1157 = vmatpush1.bf16.xpose.msra.mxu0 0
        %1158 = vmatprep.subr.bf16.mxu0 0
        %1159 = vmatpush1.bf16.xpose.msra.mxu0 0
        %1160 = vmatprep.subr.bf16.mxu0 0
        %1161 = vmatpush1.bf16.xpose.msra.mxu0 0
        %1162 = vmatprep.subr.bf16.mxu0 0
        %1163 = vmatpush1.bf16.xpose.msra.mxu0 0
        %1164 = vmatprep.subr.bf16.mxu0 0
        %1165 = vmatpush1.bf16.xpose.msra.mxu0 0
        %1166 = vmatprep.subr.bf16.mxu0 0
        %1167 = vmatpush1.bf16.xpose.msra.mxu0 0
        %1168 = vmatprep.subr.bf16.mxu0 0
        %1169 = vmatpush1.bf16.xpose.msra.mxu0 0
        %1170 = vmatprep.subr.bf16.mxu0 0
        %1171 = vmatpush1.bf16.xpose.msra.mxu0 0
        %1172 = vmatprep.subr.bf16.mxu0 0
        %1173 = vmatpush1.bf16.xpose.msra.mxu0 0
        %1174 = vmatprep.subr.bf16.mxu0 0
        %1175 = vmatpush1.bf16.xpose.msra.mxu0 0
        %1176 = vmatprep.subr.bf16.mxu0 0
        %1177 = vmatpush1.bf16.xpose.msra.mxu0 0
        %1178 = vmatprep.subr.bf16.mxu0 0
        %1179 = vmatpush1.bf16.xpose.msra.mxu0 0
        %1180 = vmatprep.subr.bf16.mxu0 0
        %1181 = vmatpush1.bf16.xpose.msra.mxu0 0
        %1182 = vmatprep.mubr.bf16.mxu0 0
        %1183 = vmatmul.mubr.bf16.gmra.mrb[0].mxu0 %v1145
        %v1184 = vpop.f32.mrb[0].mxu0
        %v1185 = vadd.f32 0.0, %v1184
        %v1186 = vpop.f32.mrb[0].mxu0
        %v1187 = vpop.f32.mrb[0].mxu0
        %v1188 = vpop.f32.mrb[0].mxu0
        %1189 = vdwg.mxu0
        %v1190 = vmul.f32 %v1038, 0.35355338
        %v1191 = vmul.f32 %v1087, 0.35355338
        %v1192 = vmul.f32 %v1136, 0.35355338
        %v1193 = vmul.f32 %v1185, 0.35355338
        %v1194 = vld [vmem:[%s4] sm:$0xff]
        %v1195 = vadd.f32 %v1190, %v1194
        %v1196 = vadd.f32 %v1191, %v1194
        %v1197 = vadd.f32 %v1192, %v1194
        %v1198 = vadd.f32 %v1193, %v1194
        %v1199 = vsel %vm996, %v1195, -inf
        %1200 = vmax.xlane.f32.xlu0 %v1199
        %v1201 = vpop.xlane.xlu0 %1200
        %v1202 = vsel %vm996, %v1196, -inf
        %1203 = vmax.xlane.f32.xlu0 %v1202
        %v1204 = vpop.xlane.xlu0 %1203
        %v1205 = vsel %vm996, %v1197, -inf
        %1206 = vmax.xlane.f32.xlu0 %v1205
        %v1207 = vpop.xlane.xlu0 %1206
        %v1208 = vsel %vm996, %v1198, -inf
        %1209 = vmax.xlane.f32.xlu0 %v1208
        %v1210 = vpop.xlane.xlu0 %1209
        %v1211 = vsub.f32 %v1195, %v1201
        %v1212 = vsub.f32 %v1196, %v1204
        %v1213 = vsub.f32 %v1197, %v1207
        %v1214 = vsub.f32 %v1198, %v1210
        %v1215 = vmul.f32 %v1211, 1.442695
        %v1216 = vpow.pop %v1215
        %v1217 = vmul.f32 %v1212, 1.442695
        %v1218 = vpow.pop %v1217
        %v1219 = vmul.f32 %v1213, 1.442695
        %v1220 = vpow.pop %v1219
        %v1221 = vmul.f32 %v1214, 1.442695
        %v1222 = vpow.pop %v1221
        %v1223 = vsel %vm996, %v1216, 0.0
        %1224 = vadd.xlane.f32.xlu0 %v1223
        %v1225 = vpop.xlane.xlu0 %1224
        %v1226 = vsel %vm996, %v1218, 0.0
        %1227 = vadd.xlane.f32.xlu0 %v1226
        %v1228 = vpop.xlane.xlu0 %1227
        %v1229 = vsel %vm996, %v1220, 0.0
        %1230 = vadd.xlane.f32.xlu0 %v1229
        %v1231 = vpop.xlane.xlu0 %1230
        %v1232 = vsel %vm996, %v1222, 0.0
        %1233 = vadd.xlane.f32.xlu0 %v1232
        %v1234 = vpop.xlane.xlu0 %1233
        %v1235 = vrcp.pop %v1225
        %v1236 = vrcp.pop %v1228
        %v1237 = vrcp.pop %v1231
        %v1238 = vrcp.pop %v1234
        %v1239 = vmul.f32 %v1216, %v1235
        %v1240 = vmul.f32 %v1218, %v1236
        %v1241 = vmul.f32 %v1220, %v1237
        %v1242 = vmul.f32 %v1222, %v1238
        %v1243 = vpack.c.bf16 %v1239, %v1239
        %v1244 = vpack.c.bf16 %v1240, %v1240
        %v1245 = vpack.c.bf16 %v1241, %v1241
        %v1246 = vpack.c.bf16 %v1242, %v1242
        %1247 = vrot.lane.b32.xlu0 %v989, 64
        %v1248 = vpop.permute.xlu0 %1247
        %v1250 = vsel %vm996, %v1243, 0
        %vm1252 = vcmask 1043456
        %v1254 = vsel %vm1252, %v1248, 0
        %1256 = vmatprep.subr.bf16.mxu0 0
        %1257 = vmatpush1.bf16.msra.mxu0 %v1254
        %1258 = vmatprep.subr.bf16.mxu0 0
        %1259 = vmatpush1.bf16.msra.mxu0 0
        %1260 = vmatprep.subr.bf16.mxu0 0
        %1261 = vmatpush1.bf16.msra.mxu0 0
        %1262 = vmatprep.subr.bf16.mxu0 0
        %1263 = vmatpush1.bf16.msra.mxu0 0
        %1264 = vmatprep.subr.bf16.mxu0 0
        %1265 = vmatpush1.bf16.msra.mxu0 0
        %1266 = vmatprep.subr.bf16.mxu0 0
        %1267 = vmatpush1.bf16.msra.mxu0 0
        %1268 = vmatprep.subr.bf16.mxu0 0
        %1269 = vmatpush1.bf16.msra.mxu0 0
        %1270 = vmatprep.subr.bf16.mxu0 0
        %1271 = vmatpush1.bf16.msra.mxu0 0
        %1272 = vmatprep.subr.bf16.mxu0 0
        %1273 = vmatpush1.bf16.msra.mxu0 0
        %1274 = vmatprep.subr.bf16.mxu0 0
        %1275 = vmatpush1.bf16.msra.mxu0 0
        %1276 = vmatprep.subr.bf16.mxu0 0
        %1277 = vmatpush1.bf16.msra.mxu0 0
        %1278 = vmatprep.subr.bf16.mxu0 0
        %1279 = vmatpush1.bf16.msra.mxu0 0
        %1280 = vmatprep.subr.bf16.mxu0 0
        %1281 = vmatpush1.bf16.msra.mxu0 0
        %1282 = vmatprep.subr.bf16.mxu0 0
        %1283 = vmatpush1.bf16.msra.mxu0 0
        %1284 = vmatprep.subr.bf16.mxu0 0
        %1285 = vmatpush1.bf16.msra.mxu0 0
        %1286 = vmatprep.subr.bf16.mxu0 0
        %1287 = vmatpush1.bf16.msra.mxu0 0
        %1288 = vmatprep.mubr.bf16.mxu0 0
        %1289 = vmatmul.mubr.bf16.gmra.mrb[0].mxu0 %v1250
        %v1290 = vpop.f32.mrb[0].mxu0
        %v1291 = vadd.f32 0.0, %v1290
        %v1292 = vpop.f32.mrb[0].mxu0
        %v1293 = vpop.f32.mrb[0].mxu0
        %v1294 = vpop.f32.mrb[0].mxu0
        %1295 = vdwg.mxu0
        %1296 = vrot.lane.b32.xlu0 %v990, 64
        %v1297 = vpop.permute.xlu0 %1296
        %v1299 = vsel %vm996, %v1244, 0
        %v1302 = vsel %vm1252, %v1297, 0
        %1304 = vmatprep.subr.bf16.mxu0 0
        %1305 = vmatpush1.bf16.msra.mxu0 %v1302
        %1306 = vmatprep.subr.bf16.mxu0 0
        %1307 = vmatpush1.bf16.msra.mxu0 0
        %1308 = vmatprep.subr.bf16.mxu0 0
        %1309 = vmatpush1.bf16.msra.mxu0 0
        %1310 = vmatprep.subr.bf16.mxu0 0
        %1311 = vmatpush1.bf16.msra.mxu0 0
        %1312 = vmatprep.subr.bf16.mxu0 0
        %1313 = vmatpush1.bf16.msra.mxu0 0
        %1314 = vmatprep.subr.bf16.mxu0 0
        %1315 = vmatpush1.bf16.msra.mxu0 0
        %1316 = vmatprep.subr.bf16.mxu0 0
        %1317 = vmatpush1.bf16.msra.mxu0 0
        %1318 = vmatprep.subr.bf16.mxu0 0
        %1319 = vmatpush1.bf16.msra.mxu0 0
        %1320 = vmatprep.subr.bf16.mxu0 0
        %1321 = vmatpush1.bf16.msra.mxu0 0
        %1322 = vmatprep.subr.bf16.mxu0 0
        %1323 = vmatpush1.bf16.msra.mxu0 0
        %1324 = vmatprep.subr.bf16.mxu0 0
        %1325 = vmatpush1.bf16.msra.mxu0 0
        %1326 = vmatprep.subr.bf16.mxu0 0
        %1327 = vmatpush1.bf16.msra.mxu0 0
        %1328 = vmatprep.subr.bf16.mxu0 0
        %1329 = vmatpush1.bf16.msra.mxu0 0
        %1330 = vmatprep.subr.bf16.mxu0 0
        %1331 = vmatpush1.bf16.msra.mxu0 0
        %1332 = vmatprep.subr.bf16.mxu0 0
        %1333 = vmatpush1.bf16.msra.mxu0 0
        %1334 = vmatprep.subr.bf16.mxu0 0
        %1335 = vmatpush1.bf16.msra.mxu0 0
        %1336 = vmatprep.mubr.bf16.mxu0 0
        %1337 = vmatmul.mubr.bf16.gmra.mrb[0].mxu0 %v1299
        %v1338 = vpop.f32.mrb[0].mxu0
        %v1339 = vadd.f32 0.0, %v1338
        %v1340 = vpop.f32.mrb[0].mxu0
        %v1341 = vpop.f32.mrb[0].mxu0
        %v1342 = vpop.f32.mrb[0].mxu0
        %1343 = vdwg.mxu0
        %1344 = vrot.lane.b32.xlu0 %v991, 64
        %v1345 = vpop.permute.xlu0 %1344
        %v1347 = vsel %vm996, %v1245, 0
        %v1350 = vsel %vm1252, %v1345, 0
        %1352 = vmatprep.subr.bf16.mxu0 0
        %1353 = vmatpush1.bf16.msra.mxu0 %v1350
        %1354 = vmatprep.subr.bf16.mxu0 0
        %1355 = vmatpush1.bf16.msra.mxu0 0
        %1356 = vmatprep.subr.bf16.mxu0 0
        %1357 = vmatpush1.bf16.msra.mxu0 0
        %1358 = vmatprep.subr.bf16.mxu0 0
        %1359 = vmatpush1.bf16.msra.mxu0 0
        %1360 = vmatprep.subr.bf16.mxu0 0
        %1361 = vmatpush1.bf16.msra.mxu0 0
        %1362 = vmatprep.subr.bf16.mxu0 0
        %1363 = vmatpush1.bf16.msra.mxu0 0
        %1364 = vmatprep.subr.bf16.mxu0 0
        %1365 = vmatpush1.bf16.msra.mxu0 0
        %1366 = vmatprep.subr.bf16.mxu0 0
        %1367 = vmatpush1.bf16.msra.mxu0 0
        %1368 = vmatprep.subr.bf16.mxu0 0
        %1369 = vmatpush1.bf16.msra.mxu0 0
        %1370 = vmatprep.subr.bf16.mxu0 0
        %1371 = vmatpush1.bf16.msra.mxu0 0
        %1372 = vmatprep.subr.bf16.mxu0 0
        %1373 = vmatpush1.bf16.msra.mxu0 0
        %1374 = vmatprep.subr.bf16.mxu0 0
        %1375 = vmatpush1.bf16.msra.mxu0 0
        %1376 = vmatprep.subr.bf16.mxu0 0
        %1377 = vmatpush1.bf16.msra.mxu0 0
        %1378 = vmatprep.subr.bf16.mxu0 0
        %1379 = vmatpush1.bf16.msra.mxu0 0
        %1380 = vmatprep.subr.bf16.mxu0 0
        %1381 = vmatpush1.bf16.msra.mxu0 0
        %1382 = vmatprep.subr.bf16.mxu0 0
        %1383 = vmatpush1.bf16.msra.mxu0 0
        %1384 = vmatprep.mubr.bf16.mxu0 0
        %1385 = vmatmul.mubr.bf16.gmra.mrb[0].mxu0 %v1347
        %v1386 = vpop.f32.mrb[0].mxu0
        %v1387 = vadd.f32 0.0, %v1386
        %v1388 = vpop.f32.mrb[0].mxu0
        %v1389 = vpop.f32.mrb[0].mxu0
        %v1390 = vpop.f32.mrb[0].mxu0
        %1391 = vdwg.mxu0
        %1392 = vrot.lane.b32.xlu0 %v992, 64
        %v1393 = vpop.permute.xlu0 %1392
        %v1395 = vsel %vm996, %v1246, 0
        %v1398 = vsel %vm1252, %v1393, 0
        %1400 = vmatprep.subr.bf16.mxu0 0
        %1401 = vmatpush1.bf16.msra.mxu0 %v1398
        %1402 = vmatprep.subr.bf16.mxu0 0
        %1403 = vmatpush1.bf16.msra.mxu0 0
        %1404 = vmatprep.subr.bf16.mxu0 0
        %1405 = vmatpush1.bf16.msra.mxu0 0
        %1406 = vmatprep.subr.bf16.mxu0 0
        %1407 = vmatpush1.bf16.msra.mxu0 0
        %1408 = vmatprep.subr.bf16.mxu0 0
        %1409 = vmatpush1.bf16.msra.mxu0 0
        %1410 = vmatprep.subr.bf16.mxu0 0
        %1411 = vmatpush1.bf16.msra.mxu0 0
        %1412 = vmatprep.subr.bf16.mxu0 0
        %1413 = vmatpush1.bf16.msra.mxu0 0
        %1414 = vmatprep.subr.bf16.mxu0 0
        %1415 = vmatpush1.bf16.msra.mxu0 0
        %1416 = vmatprep.subr.bf16.mxu0 0
        %1417 = vmatpush1.bf16.msra.mxu0 0
        %1418 = vmatprep.subr.bf16.mxu0 0
        %1419 = vmatpush1.bf16.msra.mxu0 0
        %1420 = vmatprep.subr.bf16.mxu0 0
        %1421 = vmatpush1.bf16.msra.mxu0 0
        %1422 = vmatprep.subr.bf16.mxu0 0
        %1423 = vmatpush1.bf16.msra.mxu0 0
        %1424 = vmatprep.subr.bf16.mxu0 0
        %1425 = vmatpush1.bf16.msra.mxu0 0
        %1426 = vmatprep.subr.bf16.mxu0 0
        %1427 = vmatpush1.bf16.msra.mxu0 0
        %1428 = vmatprep.subr.bf16.mxu0 0
        %1429 = vmatpush1.bf16.msra.mxu0 0
        %1430 = vmatprep.subr.bf16.mxu0 0
        %1431 = vmatpush1.bf16.msra.mxu0 0
        %1432 = vmatprep.mubr.bf16.mxu0 0
        %1433 = vmatmul.mubr.bf16.gmra.mrb[0].mxu0 %v1395
        %v1434 = vpop.f32.mrb[0].mxu0
        %v1435 = vadd.f32 0.0, %v1434
        %v1436 = vpop.f32.mrb[0].mxu0
        %v1437 = vpop.f32.mrb[0].mxu0
        %v1438 = vpop.f32.mrb[0].mxu0
        %1439 = vdwg.mxu0
        %1441 = vrot.lane.b32.xlu0 %v1339, 8
        %v1442 = vpop.permute.xlu0 %1441
        %1445 = vrot.lane.b32.xlu0 %v1387, 16
        %v1446 = vpop.permute.xlu0 %1445
        %1449 = vrot.lane.b32.xlu0 %v1435, 24
        %v1450 = vpop.permute.xlu0 %1449
        %v1452 = vsel %vm996, %v1291, %v1442
        %vm1453 = vcmask 130048
        %v1454 = vsel %vm1453, %v1452, %v1446
        %vm1455 = vcmask 195584
        %v1456 = vsel %vm1455, %v1454, %v1450
        %v1457 = vld [vmem:[%s735] sm:$0xf]
        %v1458 = vld [vmem:[%s735 + $0x4] sm:$0xf]
        %v1459 = vld [vmem:[%s735 + $0x8] sm:$0xf]
        %v1460 = vld [vmem:[%s735 + $0xc] sm:$0xf]
        %v1461 = vpack.c.bf16 %v1456, %v1456
        %v1466 = vunpack.c.l.b16 %v1457
        %v1467 = vunpack.c.l.b16 %v1458
        %v1468 = vunpack.c.l.b16 %v1459
        %v1469 = vunpack.c.l.b16 %v1460
        %v1470 = vpack.c.b16 %v1467, %v1466
        %v1471 = vpack.c.b16 %v1469, %v1468
        %v1473 = vsel %vm846, %v1461, 0
        %v1476 = vsel %vm846, %v1470, 0
        %v1479 = vsel %vm846, %v1471, 0
        %1481 = vmatprep.subr.bf16.mxu0 0
        %1482 = vmatpush1.bf16.xpose.msra.mxu0 %v1476
        %1483 = vmatprep.subr.bf16.mxu0 0
        %1484 = vmatpush1.bf16.xpose.msra.mxu0 %v1479
        %1485 = vmatprep.subr.bf16.mxu0 0
        %1486 = vmatpush1.bf16.xpose.msra.mxu0 0
        %1487 = vmatprep.subr.bf16.mxu0 0
        %1488 = vmatpush1.bf16.xpose.msra.mxu0 0
        %1489 = vmatprep.subr.bf16.mxu0 0
        %1490 = vmatpush1.bf16.xpose.msra.mxu0 0
        %1491 = vmatprep.subr.bf16.mxu0 0
        %1492 = vmatpush1.bf16.xpose.msra.mxu0 0
        %1493 = vmatprep.subr.bf16.mxu0 0
        %1494 = vmatpush1.bf16.xpose.msra.mxu0 0
        %1495 = vmatprep.subr.bf16.mxu0 0
        %1496 = vmatpush1.bf16.xpose.msra.mxu0 0
        %1497 = vmatprep.subr.bf16.mxu0 0
        %1498 = vmatpush1.bf16.xpose.msra.mxu0 0
        %1499 = vmatprep.subr.bf16.mxu0 0
        %1500 = vmatpush1.bf16.xpose.msra.mxu0 0
        %1501 = vmatprep.subr.bf16.mxu0 0
        %1502 = vmatpush1.bf16.xpose.msra.mxu0 0
        %1503 = vmatprep.subr.bf16.mxu0 0
        %1504 = vmatpush1.bf16.xpose.msra.mxu0 0
        %1505 = vmatprep.subr.bf16.mxu0 0
        %1506 = vmatpush1.bf16.xpose.msra.mxu0 0
        %1507 = vmatprep.subr.bf16.mxu0 0
        %1508 = vmatpush1.bf16.xpose.msra.mxu0 0
        %1509 = vmatprep.subr.bf16.mxu0 0
        %1510 = vmatpush1.bf16.xpose.msra.mxu0 0
        %1511 = vmatprep.subr.bf16.mxu0 0
        %1512 = vmatpush1.bf16.xpose.msra.mxu0 0
        %1513 = vmatprep.mubr.bf16.mxu0 0
        %1514 = vmatmul.mubr.bf16.gmra.mrb[0].mxu0 %v1473
        %v1515 = vpop.f32.mrb[0].mxu0
        %v1516 = vadd.f32 0.0, %v1515
        %v1517 = vpop.f32.mrb[0].mxu0
        %v1518 = vpop.f32.mrb[0].mxu0
        %v1519 = vpop.f32.mrb[0].mxu0
        %1520 = vdwg.mxu0
        %v1521 = vadd.f32 %v843, %v1516
        %v1522 = vld [vmem:[%s738] sm:$0x1]
        %v1524 = vlaneseq
        %v1525 = vshrl.u32 %v1524, 7
        %v1526 = vsub.s32 0, %v1525
        %v1527 = vrot.slane %v1522, %v1526
        %v1529 = vadd.f32 %v1521, %v1527
        %v1530 = vld [vmem:[%s741] sm:$0x1]
        %v1531 = vld [vmem:[%s744] sm:$0x1]
        %v1532 = vsel %vm846, %v1529, 0.0
        %1533 = vadd.xlane.f32.xlu0 %v1532
        %v1534 = vpop.xlane.xlu0 %1533
        %v1535 = vmul.f32 %v1534, %v850
        %v1536 = vsub.f32 %v1529, %v1535
        %v1537 = vmul.f32 %v1536, %v1536
        %v1538 = vsel %vm846, %v1537, 0.0
        %1539 = vadd.xlane.f32.xlu0 %v1538
        %v1540 = vpop.xlane.xlu0 %1539
        %v1541 = vmul.f32 %v1540, %v850
        %v1542 = vadd.f32 %v1541, 1e-05
        %v1543 = vrsqrt.pop %v1542
        %v1544 = vmul.f32 %v1536, %v1543
        %v1546 = vlaneseq
        %v1547 = vshrl.u32 %v1546, 7
        %v1548 = vsub.s32 0, %v1547
        %v1549 = vrot.slane %v1530, %v1548
        %v1551 = vmul.f32 %v1544, %v1549
        %v1553 = vlaneseq
        %v1554 = vshrl.u32 %v1553, 7
        %v1555 = vsub.s32 0, %v1554
        %v1556 = vrot.slane %v1531, %v1555
        %v1558 = vadd.f32 %v1551, %v1556
        %v1559 = vld [vmem:[%s749] sm:$0xf]
        %v1560 = vld [vmem:[%s749 + $0x4] sm:$0xf]
        %v1561 = vld [vmem:[%s749 + $0x8] sm:$0xf]
        %v1562 = vld [vmem:[%s749 + $0xc] sm:$0xf]
        %v1563 = vld [vmem:[%s749 + $0x10] sm:$0xf]
        %v1564 = vld [vmem:[%s749 + $0x14] sm:$0xf]
        %v1565 = vld [vmem:[%s749 + $0x18] sm:$0xf]
        %v1566 = vld [vmem:[%s749 + $0x1c] sm:$0xf]
        %v1567 = vpack.c.bf16 %v1558, %v1558
        %v1568 = vld [vmem:[%s752] sm:$0x1]
        %v1570 = vlaneseq
        %v1571 = vshrl.u32 %v1570, 7
        %v1572 = vsub.s32 0, %v1571
        %v1573 = vrot.slane %v1568, %v1572
        %v1583 = vunpack.c.l.b16 %v1559
        %v1584 = vunpack.c.l.b16 %v1560
        %v1585 = vunpack.c.l.b16 %v1561
        %v1586 = vunpack.c.l.b16 %v1562
        %v1587 = vunpack.c.l.b16 %v1563
        %v1588 = vunpack.c.l.b16 %v1564
        %v1589 = vunpack.c.l.b16 %v1565
        %v1590 = vunpack.c.l.b16 %v1566
        %v1591 = vpack.c.b16 %v1584, %v1583
        %v1592 = vpack.c.b16 %v1586, %v1585
        %v1593 = vpack.c.b16 %v1588, %v1587
        %v1594 = vpack.c.b16 %v1590, %v1589
        %v1596 = vsel %vm846, %v1567, 0
        %v1599 = vsel %vm846, %v1591, 0
        %v1602 = vsel %vm846, %v1592, 0
        %v1605 = vsel %vm846, %v1593, 0
        %v1608 = vsel %vm846, %v1594, 0
        %1610 = vmatprep.subr.bf16.mxu0 0
        %1611 = vmatpush1.bf16.xpose.msra.mxu0 %v1599
        %1612 = vmatprep.subr.bf16.mxu0 0
        %1613 = vmatpush1.bf16.xpose.msra.mxu0 %v1602
        %1614 = vmatprep.subr.bf16.mxu0 0
        %1615 = vmatpush1.bf16.xpose.msra.mxu0 %v1605
        %1616 = vmatprep.subr.bf16.mxu0 0
        %1617 = vmatpush1.bf16.xpose.msra.mxu0 %v1608
        %1618 = vmatprep.subr.bf16.mxu0 0
        %1619 = vmatpush1.bf16.xpose.msra.mxu0 0
        %1620 = vmatprep.subr.bf16.mxu0 0
        %1621 = vmatpush1.bf16.xpose.msra.mxu0 0
        %1622 = vmatprep.subr.bf16.mxu0 0
        %1623 = vmatpush1.bf16.xpose.msra.mxu0 0
        %1624 = vmatprep.subr.bf16.mxu0 0
        %1625 = vmatpush1.bf16.xpose.msra.mxu0 0
        %1626 = vmatprep.subr.bf16.mxu0 0
        %1627 = vmatpush1.bf16.xpose.msra.mxu0 0
        %1628 = vmatprep.subr.bf16.mxu0 0
        %1629 = vmatpush1.bf16.xpose.msra.mxu0 0
        %1630 = vmatprep.subr.bf16.mxu0 0
        %1631 = vmatpush1.bf16.xpose.msra.mxu0 0
        %1632 = vmatprep.subr.bf16.mxu0 0
        %1633 = vmatpush1.bf16.xpose.msra.mxu0 0
        %1634 = vmatprep.subr.bf16.mxu0 0
        %1635 = vmatpush1.bf16.xpose.msra.mxu0 0
        %1636 = vmatprep.subr.bf16.mxu0 0
        %1637 = vmatpush1.bf16.xpose.msra.mxu0 0
        %1638 = vmatprep.subr.bf16.mxu0 0
        %1639 = vmatpush1.bf16.xpose.msra.mxu0 0
        %1640 = vmatprep.subr.bf16.mxu0 0
        %1641 = vmatpush1.bf16.xpose.msra.mxu0 0
        %1642 = vmatprep.mubr.bf16.mxu0 0
        %1643 = vmatmul.mubr.bf16.gmra.mrb[0].mxu0 %v1596
        %v1644 = vpop.f32.mrb[0].mxu0
        %v1645 = vadd.f32 %v1573, %v1644
        %v1646 = vpop.f32.mrb[0].mxu0
        %v1647 = vpop.f32.mrb[0].mxu0
        %v1648 = vpop.f32.mrb[0].mxu0
        %1649 = vdwg.mxu0
        %v1650 = vmax.f32 %v1645, 0.0
        %v1651 = vld [vmem:[%s757] sm:$0xf]
        %v1652 = vld [vmem:[%s757 + $0x4] sm:$0xf]
        %v1653 = vld [vmem:[%s757 + $0x8] sm:$0xf]
        %v1654 = vld [vmem:[%s757 + $0xc] sm:$0xf]
        %v1655 = vpack.c.bf16 %v1650, %v1650
        %v1660 = vunpack.c.l.b16 %v1651
        %v1661 = vunpack.c.l.b16 %v1652
        %v1662 = vunpack.c.l.b16 %v1653
        %v1663 = vunpack.c.l.b16 %v1654
        %v1664 = vpack.c.b16 %v1661, %v1660
        %v1665 = vpack.c.b16 %v1663, %v1662
        %vm1666 = vcmask 523264
        %v1668 = vsel %vm1666, %v1655, 0
        %v1671 = vsel %vm1666, %v1664, 0
        %v1674 = vsel %vm1666, %v1665, 0
        %1676 = vmatprep.subr.bf16.mxu0 0
        %1677 = vmatpush1.bf16.xpose.msra.mxu0 %v1671
        %1678 = vmatprep.subr.bf16.mxu0 0
        %1679 = vmatpush1.bf16.xpose.msra.mxu0 %v1674
        %1680 = vmatprep.subr.bf16.mxu0 0
        %1681 = vmatpush1.bf16.xpose.msra.mxu0 0
        %1682 = vmatprep.subr.bf16.mxu0 0
        %1683 = vmatpush1.bf16.xpose.msra.mxu0 0
        %1684 = vmatprep.subr.bf16.mxu0 0
        %1685 = vmatpush1.bf16.xpose.msra.mxu0 0
        %1686 = vmatprep.subr.bf16.mxu0 0
        %1687 = vmatpush1.bf16.xpose.msra.mxu0 0
        %1688 = vmatprep.subr.bf16.mxu0 0
        %1689 = vmatpush1.bf16.xpose.msra.mxu0 0
        %1690 = vmatprep.subr.bf16.mxu0 0
        %1691 = vmatpush1.bf16.xpose.msra.mxu0 0
        %1692 = vmatprep.subr.bf16.mxu0 0
        %1693 = vmatpush1.bf16.xpose.msra.mxu0 0
        %1694 = vmatprep.subr.bf16.mxu0 0
        %1695 = vmatpush1.bf16.xpose.msra.mxu0 0
        %1696 = vmatprep.subr.bf16.mxu0 0
        %1697 = vmatpush1.bf16.xpose.msra.mxu0 0
        %1698 = vmatprep.subr.bf16.mxu0 0
        %1699 = vmatpush1.bf16.xpose.msra.mxu0 0
        %1700 = vmatprep.subr.bf16.mxu0 0
        %1701 = vmatpush1.bf16.xpose.msra.mxu0 0
        %1702 = vmatprep.subr.bf16.mxu0 0
        %1703 = vmatpush1.bf16.xpose.msra.mxu0 0
        %1704 = vmatprep.subr.bf16.mxu0 0
        %1705 = vmatpush1.bf16.xpose.msra.mxu0 0
        %1706 = vmatprep.subr.bf16.mxu0 0
        %1707 = vmatpush1.bf16.xpose.msra.mxu0 0
        %1708 = vmatprep.mubr.bf16.mxu0 0
        %1709 = vmatmul.mubr.bf16.gmra.mrb[0].mxu0 %v1668
        %v1710 = vpop.f32.mrb[0].mxu0
        %v1711 = vadd.f32 0.0, %v1710
        %v1712 = vpop.f32.mrb[0].mxu0
        %v1713 = vpop.f32.mrb[0].mxu0
        %v1714 = vpop.f32.mrb[0].mxu0
        %1715 = vdwg.mxu0
        %v1716 = vadd.f32 %v1529, %v1711
        %v1717 = vld [vmem:[%s760] sm:$0x1]
        %v1719 = vlaneseq
        %v1720 = vshrl.u32 %v1719, 7
        %v1721 = vsub.s32 0, %v1720
        %v1722 = vrot.slane %v1717, %v1721
        %v1724 = vadd.f32 %v1716, %v1722
        %1725 = vst.msk [vmem:[#allocation2] sm:$0xff] %vm846, %v1724
        %p1726 = scmp.eq.s32.totalorder %s37, 1
        // Predicated region
        $region97: #{tpu_custom_call.1} parent=91 // pred_check
          %p1727 = pneg %p1726
        $region98: #{tpu_custom_call.1} parent=91 // pred_check_branch
          %1729 = sbr.rel (%p1727) target = $region100
        $region99: #{tpu_custom_call.1} parent=91 // pred_region
          %v1730 = vld [vmem:[%s16] sm:$0x1]
          %v1731 = vld [vmem:[%s17] sm:$0x1]
          %v1732 = vsel %vm846, %v1724, 0.0
          %1733 = vadd.xlane.f32.xlu0 %v1732
          %v1734 = vpop.xlane.xlu0 %1733
          %v1735 = vmul.f32 %v1734, %v850
          %v1736 = vsub.f32 %v1724, %v1735
          %v1737 = vmul.f32 %v1736, %v1736
          %v1738 = vsel %vm846, %v1737, 0.0
          %1739 = vadd.xlane.f32.xlu0 %v1738
          %v1740 = vpop.xlane.xlu0 %1739
          %v1741 = vmul.f32 %v1740, %v850
          %v1742 = vadd.f32 %v1741, 1e-05
          %v1743 = vrsqrt.pop %v1742
          %v1744 = vmul.f32 %v1736, %v1743
          %v1746 = vlaneseq
          %v1747 = vshrl.u32 %v1746, 7
          %v1748 = vsub.s32 0, %v1747
          %v1749 = vrot.slane %v1730, %v1748
          %v1751 = vmul.f32 %v1744, %v1749
          %v1753 = vlaneseq
          %v1754 = vshrl.u32 %v1753, 7
          %v1755 = vsub.s32 0, %v1754
          %v1756 = vrot.slane %v1731, %v1755
          %v1758 = vadd.f32 %v1751, %v1756
          %1759 = vst.msk [vmem:[%s715] sm:$0xff] %vm846, %v1758
        $region100: #{tpu_custom_call.1} parent=91 // pred_fallthru
          _
        %s1760 = sand.u32 %s490, 1
        %s1761 = scalar_lea.sflag [#allocation4], %s1760
        %s1762 = sand.u32 %s490, 1
        %s1763 = smul.addr %s1762, 8
        %s1764 = scalar_lea.vmem [#allocation3], %s1763
        // Predicated region
        $region101: #{tpu_custom_call.1} parent=91 // pred_check
          %p1765 = pneg %p500
        $region102: #{tpu_custom_call.1} parent=91 // pred_check_branch
          %1767 = sbr.rel (%p1765) target = $region104
        $region103: #{tpu_custom_call.1} parent=91 // pred_region
          %s1769 = ssub.s32 128, 128
          %1770 = vsyncadd %s1761, %s1769
          %s1771 = smul.addr %s36, 128
          %s1772 = scalar_lea.hbm %s18, %s1771
          %s1774 = sshll.u32 %s1764, 4
          %s1775 = int_to_ptr.vmem [resolvable:$true] %s1774
          %1777 = dma.vmem_to_hbm [thread:$0]  %s1775, 128, %s1772, %s1761
        $region104: #{tpu_custom_call.1} parent=91 // pred_fallthru
          _
      $region92: #{tpu_custom_call.1} parent=5 // pred_fallthru
        _
      %p1778 = scmp.le.s32.totalorder 2, %s27
      // Predicated region
      $region105: #{tpu_custom_call.1} parent=5 // pred_check
        %p1779 = pneg %p1778
      $region106: #{tpu_custom_call.1} parent=5 // pred_check_branch
        %1781 = sbr.rel (%p1779) target = $region108
      $region107: #{tpu_custom_call.1} parent=5 // pred_region
        %s1782 = ssub.s32 %s27, 2
        // Predicated region
        $region109: #{tpu_custom_call.1} parent=107 // pred_check
          %p1783 = pneg %p506
        $region110: #{tpu_custom_call.1} parent=107 // pred_check_branch
          %1785 = sbr.rel (%p1783) target = $region112
        $region111: #{tpu_custom_call.1} parent=107 // pred_region
          %s1786 = sand.u32 %s491, 1
          %s1787 = scalar_lea.sflag [#allocation4], %s1786
          %s1788 = sand.u32 %s491, 1
          %s1789 = smul.addr %s1788, 8
          %s1790 = scalar_lea.vmem [#allocation3], %s1789
          %1791 = dma.done %s1787, 128
        $region112: #{tpu_custom_call.1} parent=107 // pred_fallthru
          _
      $region108: #{tpu_custom_call.1} parent=5 // pred_fallthru
        _
    $region6: #{tpu_custom_call.1} parent=1 // loop_footer
      %s31 = sadd.s32 1, %s27
    $region7: #{tpu_custom_call.1} parent=1 // loop_footer_branch
      %26 = sbr.rel target = $region3
    $region8: #{tpu_custom_call.1} parent=1 // loop_exit
      _
    %1792 = vsyncpa [#allocation4], 1
    %s1793 = scalar_lea.sflag [#allocation4], 1
    %1794 = vsyncpa %s1793, 1

</llo_original>
